<compile_context>
chip_gen: v6e
topology: v6e:2x2x1
jax: 0.10.0
libtpu: 0.0.40
codegen_flags: <defaults>
</compile_context>

<pallas_src>
import numpy as np
import jax
import jax.numpy as jnp
from jax.experimental import pallas as pl
from jax.experimental.pallas import tpu as pltpu


# --------------------------------------------------------------------------
# Pallas kernels
# --------------------------------------------------------------------------
def _backbone_classifier_kernel(p_ref, wb_ref, bb_ref, wc1_ref, wc2_ref,
                                bc_ref, o_ref):
    # p_ref  : (1, 2, C*9, TS) bf16  -- im2col patches for (x1, x2) of one sample
    # wb_ref : (Cf, C*9) bf16, bb_ref : (Cf, 1) f32
    # wc*_ref: (ncls, Cf) bf16, bc_ref: (ncls, 1) f32
    # o_ref  : (1, ncls, TS) bf16    -- classifier logits (pre-upsample)
    wb = wb_ref[...]
    bb = bb_ref[...]
    # backbone conv (as im2col matmul) + ReLU for both images of the pair
    f1 = jnp.dot(wb, p_ref[0, 0, :, :], preferred_element_type=jnp.float32) + bb
    f1 = jnp.maximum(f1, 0.0).astype(jnp.bfloat16)
    f2 = jnp.dot(wb, p_ref[0, 1, :, :], preferred_element_type=jnp.float32) + bb
    f2 = jnp.maximum(f2, 0.0).astype(jnp.bfloat16)
    # fused channel-concat + 1x1-conv classifier:
    #   Wc @ concat([f1, f2]) == Wc[:, :Cf] @ f1 + Wc[:, Cf:] @ f2
    logits = (jnp.dot(wc1_ref[...], f1, preferred_element_type=jnp.float32)
              + jnp.dot(wc2_ref[...], f2, preferred_element_type=jnp.float32)
              + bc_ref[...])
    o_ref[0] = logits.astype(o_ref.dtype)


def _bilinear_kernel(x_ref, ah_ref, awt_ref, o_ref):
    # x_ref  : (BT, Ho, Wo) bf16 -- BT images per grid step (amortizes step cost)
    # ah_ref : (H, Ho) bf16      -- row-interpolation matrix (grid-invariant)
    # awt_ref: (Wo, W) bf16      -- col-interpolation matrix, pre-transposed
    # o_ref  : (BT, H, W) f32
    ah = ah_ref[...]
    awt = awt_ref[...]
    for i in range(x_ref.shape[0]):          # static unroll over the image tile
        tmp = jnp.dot(ah, x_ref[i], preferred_element_type=jnp.float32)
        o_ref[i] = jnp.dot(tmp.astype(awt.dtype), awt,
                           preferred_element_type=jnp.float32)


# --------------------------------------------------------------------------
# Pallas wrappers
# --------------------------------------------------------------------------
def _pick_lane_tile(s):
    """Largest lane tile: whole axis if small, else biggest 128-multiple divisor."""
    if s <= 2048:
        return s
    for cand in (2048, 1536, 1024, 512, 256, 128):
        if s % cand == 0:
            return cand
    return s  # fallback: un-tiled (only hit for odd shapes; fine for tests)


def backbone_classifier(patches, params):
    """patches: (N, 2, C*9, S) bf16 -> logits (N, ncls, S) bf16."""
    n, _, k9, s = patches.shape
    cf = params["w_backbone"].shape[0]
    ncls = params["w_cls1"].shape[0]

    # Lane tile over the flattened-spatial axis. Up to 2048 lanes keeps the
    # 2x256^2 MXUs of v6e/v7x fed while the per-step VMEM footprint
    # (2 * (k9 + cf + ncls) * TS * 2B, double-buffered) stays far below the
    # 16 MiB (v5e) / 32 MiB (v6e/v7x) scoped-VMEM defaults.
    ts = _pick_lane_tile(s)
    assert s % ts == 0, "flattened spatial size must divide the lane tile"

    return pl.pallas_call(
        _backbone_classifier_kernel,
        out_shape=jax.ShapeDtypeStruct((n, ncls, s), jnp.bfloat16),
        grid=(n, s // ts),
        in_specs=[
            pl.BlockSpec((1, 2, k9, ts), lambda i, j: (i, 0, 0, j)),
            pl.BlockSpec((cf, k9), lambda i, j: (0, 0)),     # weights resident
            pl.BlockSpec((cf, 1), lambda i, j: (0, 0)),
            pl.BlockSpec((ncls, cf), lambda i, j: (0, 0)),
            pl.BlockSpec((ncls, cf), lambda i, j: (0, 0)),
            pl.BlockSpec((ncls, 1), lambda i, j: (0, 0)),
        ],
        out_specs=pl.BlockSpec((1, ncls, ts), lambda i, j: (i, 0, j)),
        compiler_params=pltpu.CompilerParams(
            dimension_semantics=("parallel", "parallel")),
    )(patches, params["w_backbone"], params["b_backbone"],
      params["w_cls1"], params["w_cls2"], params["b_cls"])


def _pick_image_tile(b):
    # >=2 grid steps keeps both v7x TensorCores busy via the "parallel" axis.
    for cand in (8, 4, 2):
        if b % cand == 0 and b // cand >= 2:
            return cand
    return 1 if b > 1 else b


def bilinear_upsample(x, a_h, a_wt):
    """x: (B, Ho, Wo) bf16 -> (B, H, W) f32 via A_h @ img @ A_w^T."""
    b, ho, wo = x.shape
    hh = a_h.shape[0]
    ww = a_wt.shape[1]
    bt = _pick_image_tile(b)
    return pl.pallas_call(
        _bilinear_kernel,
        out_shape=jax.ShapeDtypeStruct((b, hh, ww), jnp.float32),
        grid=(b // bt,),
        in_specs=[
            pl.BlockSpec((bt, ho, wo), lambda i: (i, 0, 0)),
            pl.BlockSpec((hh, ho), lambda i: (0, 0)),   # grid-invariant: resident
            pl.BlockSpec((wo, ww), lambda i: (0, 0)),
        ],
        out_specs=pl.BlockSpec((bt, hh, ww), lambda i: (i, 0, 0)),
        compiler_params=pltpu.CompilerParams(dimension_semantics=("parallel",)),
    )(x, a_h, a_wt)


# --------------------------------------------------------------------------
# Glue: im2col, interpolation matrices, parameter init
# --------------------------------------------------------------------------
def im2col_channels_major(xpair):
    """xpair: (N, 2, C, H, W) f32 -> patches (N, 2, C*9, Ho*Wo) bf16.

    Conv2d(k=3, stride=2, pad=1); rows are (channel, kh, kw), lanes are the
    flattened output spatial positions (so the downstream matmul output is
    lane-dense and already in channels-major / NCHW order).
    """
    n, two, c, h, w = xpair.shape
    assert h % 2 == 0 and w % 2 == 0, "even spatial sizes assumed (stride-2 conv)"
    ho, wo = h // 2, w // 2
    xp = jnp.pad(xpair, ((0, 0), (0, 0), (0, 0), (1, 1), (1, 1)))
    slabs = []
    for kh in range(3):
        for kw in range(3):
            slabs.append(xp[:, :, :, kh:kh + 2 * ho:2, kw:kw + 2 * wo:2])
    pat = jnp.stack(slabs, axis=3)                       # (N, 2, C, 9, Ho, Wo)
    pat = pat.reshape(n, two, c * 9, ho * wo)            # row idx = c*9 + kh*3+kw
    # TODO(synk): fuse this gather into the backbone kernel (phase-split input
    # + shifted contiguous slices) so the patch tensor never lands in HBM.
    return pat.astype(jnp.bfloat16), (ho, wo)


def bilinear_matrix(in_size, out_size):
    """Matches F.interpolate(mode='bilinear', align_corners=False)."""
    i = np.arange(out_size, dtype=np.float64)
    src = (i + 0.5) * (in_size / out_size) - 0.5
    src = np.maximum(src, 0.0)
    i0 = np.minimum(np.floor(src).astype(np.int64), in_size - 1)
    i1 = np.minimum(i0 + 1, in_size - 1)
    frac = src - i0
    a = np.zeros((out_size, in_size), dtype=np.float32)
    a[np.arange(out_size), i0] += (1.0 - frac).astype(np.float32)
    a[np.arange(out_size), i1] += frac.astype(np.float32)
    return jnp.asarray(a)


def init_params(key, c_in, c_feat, n_classes):
    k1, k2, k3, k4 = jax.random.split(key, 4)
    # backbone conv: (Cf, Cin, 3, 3) -> (Cf, Cin*9)   [col index = c*9 + kh*3+kw]
    wb = jax.random.normal(k1, (c_feat, c_in, 3, 3), jnp.float32) * 0.1
    bb = jax.random.normal(k2, (c_feat,), jnp.float32) * 0.1
    # classifier 1x1 conv: (ncls, 2*Cf, 1, 1); split so concat is never built
    wc = jax.random.normal(k3, (n_classes, 2 * c_feat, 1, 1), jnp.float32) * 0.1
    bc = jax.random.normal(k4, (n_classes,), jnp.float32) * 0.1
    wc2d = wc.reshape(n_classes, 2 * c_feat)
    return {
        "w_backbone": wb.reshape(c_feat, c_in * 9).astype(jnp.bfloat16),
        "b_backbone": bb.reshape(c_feat, 1),                       # f32
        "w_cls1": wc2d[:, :c_feat].astype(jnp.bfloat16),
        "w_cls2": wc2d[:, c_feat:].astype(jnp.bfloat16),
        "b_cls": bc.reshape(n_classes, 1),                         # f32
    }


# --------------------------------------------------------------------------
# Forward pass (mirrors DeepLabChangeDetectionModel.forward)
# --------------------------------------------------------------------------
def deeplab_change_detection_forward(params, x1, x2):
    n, _, h, w = x1.shape
    ncls = params["b_cls"].shape[0]

    # Both images of the pair go through one backbone pallas_call (pair axis in
    # the block), and the concat + classifier are fused into the same kernel.
    xpair = jnp.stack([x1, x2], axis=1)                   # (N, 2, C, H, W)
    patches, (ho, wo) = im2col_channels_major(xpair)      # (N, 2, C*9, Ho*Wo)
    logits = backbone_classifier(patches, params)         # (N, ncls, Ho*Wo)

    # Pure reshape (channels-major layout => no transpose needed anywhere).
    logits_img = logits.reshape(n * ncls, ho, wo)

    a_h = bilinear_matrix(ho, h).astype(jnp.bfloat16)     # (H, Ho)
    a_wt = bilinear_matrix(wo, w).T.astype(jnp.bfloat16)  # (Wo, W)
    up = bilinear_upsample(logits_img, a_h, a_wt)         # (N*ncls, H, W) f32
    return up.reshape(n, ncls, h, w)


# --------------------------------------------------------------------------
if __name__ == "__main__":
    N, C_IN, H, W = 2, 4, 16, 16
    C_FEAT, N_CLASSES = 8, 4

    key = jax.random.PRNGKey(0)
    kp, kx1, kx2 = jax.random.split(key, 3)
    params = init_params(kp, C_IN, C_FEAT, N_CLASSES)
    x1 = jax.random.normal(kx1, (N, C_IN, H, W), jnp.float32)
    x2 = jax.random.normal(kx2, (N, C_IN, H, W), jnp.float32)

    fwd = jax.jit(deeplab_change_detection_forward)
    out = fwd(params, x1, x2)
    out = jax.block_until_ready(out)
    assert out.shape == (N, N_CLASSES, H, W), out.shape
    assert bool(jnp.all(jnp.isfinite(out)))
    print("KERNEL_OK")
</pallas_src>

<mosaic_0001>
module attributes {stable_mosaic.version = 11 : i64} {
  func.func @_backbone_classifier_kernel(%arg0: i32, %arg1: i32, %arg2: memref<1x2x36x64xbf16, #tpu.memory_space<vmem>>, %arg3: memref<8x36xbf16, #tpu.memory_space<vmem>>, %arg4: memref<8x1xf32, #tpu.memory_space<vmem>>, %arg5: memref<4x8xbf16, #tpu.memory_space<vmem>>, %arg6: memref<4x8xbf16, #tpu.memory_space<vmem>>, %arg7: memref<4x1xf32, #tpu.memory_space<vmem>>, %arg8: memref<1x4x64xbf16, #tpu.memory_space<vmem>>) attributes {dimension_semantics = [#tpu.dimension_semantics<parallel>, #tpu.dimension_semantics<parallel>], iteration_bounds = array<i64: 2, 1>, scalar_prefetch = 0 : i64, scratch_operands = 0 : i64, tpu.core_type = #tpu.core_type<tc>, window_params = [{transform_indices = @transform_0, window_bounds = array<i64: 1, 2, 36, 64>}, {pipeline_mode = #tpu.pipeline_mode<synchronous>, transform_indices = @transform_1, window_bounds = array<i64: 8, 36>}, {pipeline_mode = #tpu.pipeline_mode<synchronous>, transform_indices = @transform_2, window_bounds = array<i64: 8, 1>}, {pipeline_mode = #tpu.pipeline_mode<synchronous>, transform_indices = @transform_3, window_bounds = array<i64: 4, 8>}, {pipeline_mode = #tpu.pipeline_mode<synchronous>, transform_indices = @transform_4, window_bounds = array<i64: 4, 8>}, {pipeline_mode = #tpu.pipeline_mode<synchronous>, transform_indices = @transform_5, window_bounds = array<i64: 4, 1>}, {transform_indices = @transform_6, window_bounds = array<i64: 1, 4, 64>}]} {
    %c0 = arith.constant 0 : index
    %c0_0 = arith.constant 0 : index
    %0 = vector.load %arg3[%c0, %c0_0] : memref<8x36xbf16, #tpu.memory_space<vmem>>, vector<8x36xbf16>
    %c0_1 = arith.constant 0 : index
    %c0_2 = arith.constant 0 : index
    %1 = vector.load %arg4[%c0_1, %c0_2] : memref<8x1xf32, #tpu.memory_space<vmem>>, vector<8x1xf32>
    %c0_3 = arith.constant 0 : index
    %c0_4 = arith.constant 0 : index
    %c0_5 = arith.constant 0 : index
    %c0_6 = arith.constant 0 : index
    %2 = vector.load %arg2[%c0_3, %c0_4, %c0_5, %c0_6] : memref<1x2x36x64xbf16, #tpu.memory_space<vmem>>, vector<1x1x36x64xbf16>
    %3 = vector.shape_cast %2 : vector<1x1x36x64xbf16> to vector<36x64xbf16>
    %cst = arith.constant dense<0.000000e+00> : vector<8x64xf32>
    %4 = tpu.matmul %0, %3, %cst {dimension_numbers = #tpu.dot_dimension_numbers<[1], [0], [0], [1], [0, 0, 1, 1], [], []>} : vector<8x36xbf16>, vector<36x64xbf16>, vector<8x64xf32> -> vector<8x64xf32>
    %5 = vector.broadcast %1 : vector<8x1xf32> to vector<8x64xf32>
    %6 = arith.addf %4, %5 : vector<8x64xf32>
    %cst_7 = arith.constant 0.000000e+00 : f32
    %7 = vector.broadcast %cst_7 : f32 to vector<8x64xf32>
    %8 = arith.maximumf %6, %7 : vector<8x64xf32>
    %9 = arith.truncf %8 : vector<8x64xf32> to vector<8x64xbf16>
    %c0_8 = arith.constant 0 : index
    %c1 = arith.constant 1 : index
    %c0_9 = arith.constant 0 : index
    %c0_10 = arith.constant 0 : index
    %10 = vector.load %arg2[%c0_8, %c1, %c0_9, %c0_10] : memref<1x2x36x64xbf16, #tpu.memory_space<vmem>>, vector<1x1x36x64xbf16>
    %11 = vector.shape_cast %10 : vector<1x1x36x64xbf16> to vector<36x64xbf16>
    %cst_11 = arith.constant dense<0.000000e+00> : vector<8x64xf32>
    %12 = tpu.matmul %0, %11, %cst_11 {dimension_numbers = #tpu.dot_dimension_numbers<[1], [0], [0], [1], [0, 0, 1, 1], [], []>} : vector<8x36xbf16>, vector<36x64xbf16>, vector<8x64xf32> -> vector<8x64xf32>
    %13 = vector.broadcast %1 : vector<8x1xf32> to vector<8x64xf32>
    %14 = arith.addf %12, %13 : vector<8x64xf32>
    %cst_12 = arith.constant 0.000000e+00 : f32
    %15 = vector.broadcast %cst_12 : f32 to vector<8x64xf32>
    %16 = arith.maximumf %14, %15 : vector<8x64xf32>
    %17 = arith.truncf %16 : vector<8x64xf32> to vector<8x64xbf16>
    %c0_13 = arith.constant 0 : index
    %c0_14 = arith.constant 0 : index
    %18 = vector.load %arg5[%c0_13, %c0_14] : memref<4x8xbf16, #tpu.memory_space<vmem>>, vector<4x8xbf16>
    %cst_15 = arith.constant dense<0.000000e+00> : vector<4x64xf32>
    %19 = tpu.matmul %18, %9, %cst_15 {dimension_numbers = #tpu.dot_dimension_numbers<[1], [0], [0], [1], [0, 0, 1, 1], [], []>} : vector<4x8xbf16>, vector<8x64xbf16>, vector<4x64xf32> -> vector<4x64xf32>
    %c0_16 = arith.constant 0 : index
    %c0_17 = arith.constant 0 : index
    %20 = vector.load %arg6[%c0_16, %c0_17] : memref<4x8xbf16, #tpu.memory_space<vmem>>, vector<4x8xbf16>
    %cst_18 = arith.constant dense<0.000000e+00> : vector<4x64xf32>
    %21 = tpu.matmul %20, %17, %cst_18 {dimension_numbers = #tpu.dot_dimension_numbers<[1], [0], [0], [1], [0, 0, 1, 1], [], []>} : vector<4x8xbf16>, vector<8x64xbf16>, vector<4x64xf32> -> vector<4x64xf32>
    %22 = arith.addf %19, %21 : vector<4x64xf32>
    %c0_19 = arith.constant 0 : index
    %c0_20 = arith.constant 0 : index
    %23 = vector.load %arg7[%c0_19, %c0_20] : memref<4x1xf32, #tpu.memory_space<vmem>>, vector<4x1xf32>
    %24 = vector.broadcast %23 : vector<4x1xf32> to vector<4x64xf32>
    %25 = arith.addf %22, %24 : vector<4x64xf32>
    %26 = arith.truncf %25 : vector<4x64xf32> to vector<4x64xbf16>
    %c0_21 = arith.constant 0 : index
    %c0_22 = arith.constant 0 : index
    %c0_23 = arith.constant 0 : index
    %27 = vector.load %arg8[%c0_21, %c0_22, %c0_23] : memref<1x4x64xbf16, #tpu.memory_space<vmem>>, vector<1x4x64xbf16>
    %28 = vector.shape_cast %27 : vector<1x4x64xbf16> to vector<4x64xbf16>
    %29 = vector.shape_cast %26 : vector<4x64xbf16> to vector<1x4x64xbf16>
    tpu.vector_store %arg8[%c0_21, %c0_22, %c0_23], %29 {strides = array<i32>} : memref<1x4x64xbf16, #tpu.memory_space<vmem>>, vector<1x4x64xbf16>,
    return
  }
  func.func @transform_0(%arg0: i32, %arg1: i32) -> (i32, i32, i32, i32) {
    %c0_i32 = arith.constant 0 : i32
    %c0_i32_0 = arith.constant 0 : i32
    %c0_i32_1 = arith.constant 0 : i32
    return %arg0, %c0_i32, %c0_i32_0, %arg1 : i32, i32, i32, i32
  }
  func.func @transform_1(%arg0: i32, %arg1: i32) -> (i32, i32) {
    %c0_i32 = arith.constant 0 : i32
    %c0_i32_0 = arith.constant 0 : i32
    %c0_i32_1 = arith.constant 0 : i32
    return %c0_i32, %c0_i32_0 : i32, i32
  }
  func.func @transform_2(%arg0: i32, %arg1: i32) -> (i32, i32) {
    %c0_i32 = arith.constant 0 : i32
    %c0_i32_0 = arith.constant 0 : i32
    %c0_i32_1 = arith.constant 0 : i32
    return %c0_i32, %c0_i32_0 : i32, i32
  }
  func.func @transform_3(%arg0: i32, %arg1: i32) -> (i32, i32) {
    %c0_i32 = arith.constant 0 : i32
    %c0_i32_0 = arith.constant 0 : i32
    %c0_i32_1 = arith.constant 0 : i32
    return %c0_i32, %c0_i32_0 : i32, i32
  }
  func.func @transform_4(%arg0: i32, %arg1: i32) -> (i32, i32) {
    %c0_i32 = arith.constant 0 : i32
    %c0_i32_0 = arith.constant 0 : i32
    %c0_i32_1 = arith.constant 0 : i32
    return %c0_i32, %c0_i32_0 : i32, i32
  }
  func.func @transform_5(%arg0: i32, %arg1: i32) -> (i32, i32) {
    %c0_i32 = arith.constant 0 : i32
    %c0_i32_0 = arith.constant 0 : i32
    %c0_i32_1 = arith.constant 0 : i32
    return %c0_i32, %c0_i32_0 : i32, i32
  }
  func.func @transform_6(%arg0: i32, %arg1: i32) -> (i32, i32, i32) {
    %c0_i32 = arith.constant 0 : i32
    %c0_i32_0 = arith.constant 0 : i32
    return %arg0, %c0_i32, %arg1 : i32, i32, i32
  }
}

module attributes {stable_mosaic.version = 11 : i64} {
  func.func @_bilinear_kernel(%arg0: i32, %arg1: memref<4x8x8xbf16, #tpu.memory_space<vmem>>, %arg2: memref<16x8xbf16, #tpu.memory_space<vmem>>, %arg3: memref<8x16xbf16, #tpu.memory_space<vmem>>, %arg4: memref<4x16x16xf32, #tpu.memory_space<vmem>>) attributes {dimension_semantics = [#tpu.dimension_semantics<parallel>], iteration_bounds = array<i64: 2>, scalar_prefetch = 0 : i64, scratch_operands = 0 : i64, tpu.core_type = #tpu.core_type<tc>, window_params = [{transform_indices = @transform_0, window_bounds = array<i64: 4, 8, 8>}, {pipeline_mode = #tpu.pipeline_mode<synchronous>, transform_indices = @transform_1, window_bounds = array<i64: 16, 8>}, {pipeline_mode = #tpu.pipeline_mode<synchronous>, transform_indices = @transform_2, window_bounds = array<i64: 8, 16>}, {transform_indices = @transform_3, window_bounds = array<i64: 4, 16, 16>}]} {
    %c0 = arith.constant 0 : index
    %c0_0 = arith.constant 0 : index
    %0 = vector.load %arg2[%c0, %c0_0] : memref<16x8xbf16, #tpu.memory_space<vmem>>, vector<16x8xbf16>
    %c0_1 = arith.constant 0 : index
    %c0_2 = arith.constant 0 : index
    %1 = vector.load %arg3[%c0_1, %c0_2] : memref<8x16xbf16, #tpu.memory_space<vmem>>, vector<8x16xbf16>
    %c0_3 = arith.constant 0 : index
    %c0_4 = arith.constant 0 : index
    %c0_5 = arith.constant 0 : index
    %2 = vector.load %arg1[%c0_3, %c0_4, %c0_5] : memref<4x8x8xbf16, #tpu.memory_space<vmem>>, vector<1x8x8xbf16>
    %3 = vector.shape_cast %2 : vector<1x8x8xbf16> to vector<8x8xbf16>
    %cst = arith.constant dense<0.000000e+00> : vector<16x8xf32>
    %4 = tpu.matmul %0, %3, %cst {dimension_numbers = #tpu.dot_dimension_numbers<[1], [0], [0], [1], [0, 0, 1, 1], [], []>} : vector<16x8xbf16>, vector<8x8xbf16>, vector<16x8xf32> -> vector<16x8xf32>
    %5 = arith.truncf %4 : vector<16x8xf32> to vector<16x8xbf16>
    %cst_6 = arith.constant dense<0.000000e+00> : vector<16x16xf32>
    %6 = tpu.matmul %5, %1, %cst_6 {dimension_numbers = #tpu.dot_dimension_numbers<[1], [0], [0], [1], [0, 0, 1, 1], [], []>} : vector<16x8xbf16>, vector<8x16xbf16>, vector<16x16xf32> -> vector<16x16xf32>
    %c0_7 = arith.constant 0 : index
    %c0_8 = arith.constant 0 : index
    %c0_9 = arith.constant 0 : index
    %7 = vector.load %arg4[%c0_7, %c0_8, %c0_9] : memref<4x16x16xf32, #tpu.memory_space<vmem>>, vector<1x16x16xf32>
    %8 = vector.shape_cast %7 : vector<1x16x16xf32> to vector<16x16xf32>
    %9 = vector.shape_cast %6 : vector<16x16xf32> to vector<1x16x16xf32>
    tpu.vector_store %arg4[%c0_7, %c0_8, %c0_9], %9 {strides = array<i32>} : memref<4x16x16xf32, #tpu.memory_space<vmem>>, vector<1x16x16xf32>,
    %c1 = arith.constant 1 : index
    %c0_10 = arith.constant 0 : index
    %c0_11 = arith.constant 0 : index
    %10 = vector.load %arg1[%c1, %c0_10, %c0_11] : memref<4x8x8xbf16, #tpu.memory_space<vmem>>, vector<1x8x8xbf16>
    %11 = vector.shape_cast %10 : vector<1x8x8xbf16> to vector<8x8xbf16>
    %cst_12 = arith.constant dense<0.000000e+00> : vector<16x8xf32>
    %12 = tpu.matmul %0, %11, %cst_12 {dimension_numbers = #tpu.dot_dimension_numbers<[1], [0], [0], [1], [0, 0, 1, 1], [], []>} : vector<16x8xbf16>, vector<8x8xbf16>, vector<16x8xf32> -> vector<16x8xf32>
    %13 = arith.truncf %12 : vector<16x8xf32> to vector<16x8xbf16>
    %cst_13 = arith.constant dense<0.000000e+00> : vector<16x16xf32>
    %14 = tpu.matmul %13, %1, %cst_13 {dimension_numbers = #tpu.dot_dimension_numbers<[1], [0], [0], [1], [0, 0, 1, 1], [], []>} : vector<16x8xbf16>, vector<8x16xbf16>, vector<16x16xf32> -> vector<16x16xf32>
    %c1_14 = arith.constant 1 : index
    %c0_15 = arith.constant 0 : index
    %c0_16 = arith.constant 0 : index
    %15 = vector.load %arg4[%c1_14, %c0_15, %c0_16] : memref<4x16x16xf32, #tpu.memory_space<vmem>>, vector<1x16x16xf32>
    %16 = vector.shape_cast %15 : vector<1x16x16xf32> to vector<16x16xf32>
    %17 = vector.shape_cast %14 : vector<16x16xf32> to vector<1x16x16xf32>
    tpu.vector_store %arg4[%c1_14, %c0_15, %c0_16], %17 {strides = array<i32>} : memref<4x16x16xf32, #tpu.memory_space<vmem>>, vector<1x16x16xf32>,
    %c2 = arith.constant 2 : index
    %c0_17 = arith.constant 0 : index
    %c0_18 = arith.constant 0 : index
    %18 = vector.load %arg1[%c2, %c0_17, %c0_18] : memref<4x8x8xbf16, #tpu.memory_space<vmem>>, vector<1x8x8xbf16>
    %19 = vector.shape_cast %18 : vector<1x8x8xbf16> to vector<8x8xbf16>
    %cst_19 = arith.constant dense<0.000000e+00> : vector<16x8xf32>
    %20 = tpu.matmul %0, %19, %cst_19 {dimension_numbers = #tpu.dot_dimension_numbers<[1], [0], [0], [1], [0, 0, 1, 1], [], []>} : vector<16x8xbf16>, vector<8x8xbf16>, vector<16x8xf32> -> vector<16x8xf32>
    %21 = arith.truncf %20 : vector<16x8xf32> to vector<16x8xbf16>
    %cst_20 = arith.constant dense<0.000000e+00> : vector<16x16xf32>
    %22 = tpu.matmul %21, %1, %cst_20 {dimension_numbers = #tpu.dot_dimension_numbers<[1], [0], [0], [1], [0, 0, 1, 1], [], []>} : vector<16x8xbf16>, vector<8x16xbf16>, vector<16x16xf32> -> vector<16x16xf32>
    %c2_21 = arith.constant 2 : index
    %c0_22 = arith.constant 0 : index
    %c0_23 = arith.constant 0 : index
    %23 = vector.load %arg4[%c2_21, %c0_22, %c0_23] : memref<4x16x16xf32, #tpu.memory_space<vmem>>, vector<1x16x16xf32>
    %24 = vector.shape_cast %23 : vector<1x16x16xf32> to vector<16x16xf32>
    %25 = vector.shape_cast %22 : vector<16x16xf32> to vector<1x16x16xf32>
    tpu.vector_store %arg4[%c2_21, %c0_22, %c0_23], %25 {strides = array<i32>} : memref<4x16x16xf32, #tpu.memory_space<vmem>>, vector<1x16x16xf32>,
    %c3 = arith.constant 3 : index
    %c0_24 = arith.constant 0 : index
    %c0_25 = arith.constant 0 : index
    %26 = vector.load %arg1[%c3, %c0_24, %c0_25] : memref<4x8x8xbf16, #tpu.memory_space<vmem>>, vector<1x8x8xbf16>
    %27 = vector.shape_cast %26 : vector<1x8x8xbf16> to vector<8x8xbf16>
    %cst_26 = arith.constant dense<0.000000e+00> : vector<16x8xf32>
    %28 = tpu.matmul %0, %27, %cst_26 {dimension_numbers = #tpu.dot_dimension_numbers<[1], [0], [0], [1], [0, 0, 1, 1], [], []>} : vector<16x8xbf16>, vector<8x8xbf16>, vector<16x8xf32> -> vector<16x8xf32>
    %29 = arith.truncf %28 : vector<16x8xf32> to vector<16x8xbf16>
    %cst_27 = arith.constant dense<0.000000e+00> : vector<16x16xf32>
    %30 = tpu.matmul %29, %1, %cst_27 {dimension_numbers = #tpu.dot_dimension_numbers<[1], [0], [0], [1], [0, 0, 1, 1], [], []>} : vector<16x8xbf16>, vector<8x16xbf16>, vector<16x16xf32> -> vector<16x16xf32>
    %c3_28 = arith.constant 3 : index
    %c0_29 = arith.constant 0 : index
    %c0_30 = arith.constant 0 : index
    %31 = vector.load %arg4[%c3_28, %c0_29, %c0_30] : memref<4x16x16xf32, #tpu.memory_space<vmem>>, vector<1x16x16xf32>
    %32 = vector.shape_cast %31 : vector<1x16x16xf32> to vector<16x16xf32>
    %33 = vector.shape_cast %30 : vector<16x16xf32> to vector<1x16x16xf32>
    tpu.vector_store %arg4[%c3_28, %c0_29, %c0_30], %33 {strides = array<i32>} : memref<4x16x16xf32, #tpu.memory_space<vmem>>, vector<1x16x16xf32>,
    return
  }
  func.func @transform_0(%arg0: i32) -> (i32, i32, i32) {
    %c0_i32 = arith.constant 0 : i32
    %c0_i32_0 = arith.constant 0 : i32
    %c0_i32_1 = arith.constant 0 : i32
    return %arg0, %c0_i32, %c0_i32_0 : i32, i32, i32
  }
  func.func @transform_1(%arg0: i32) -> (i32, i32) {
    %c0_i32 = arith.constant 0 : i32
    %c0_i32_0 = arith.constant 0 : i32
    %c0_i32_1 = arith.constant 0 : i32
    return %c0_i32, %c0_i32_0 : i32, i32
  }
  func.func @transform_2(%arg0: i32) -> (i32, i32) {
    %c0_i32 = arith.constant 0 : i32
    %c0_i32_0 = arith.constant 0 : i32
    %c0_i32_1 = arith.constant 0 : i32
    return %c0_i32, %c0_i32_0 : i32, i32
  }
  func.func @transform_3(%arg0: i32) -> (i32, i32, i32) {
    %c0_i32 = arith.constant 0 : i32
    %c0_i32_0 = arith.constant 0 : i32
    %c0_i32_1 = arith.constant 0 : i32
    return %arg0, %c0_i32, %c0_i32_0 : i32, i32, i32
  }
}

</mosaic_0001>

<llo_original>
// kernel: deeplab_change_detection_forward.2
$region0: #{deeplab_change_detection_forward.2}
  #allocation0 [shape = 'u32[]', space=smem, size = 0x4, offset = 0x4, fixed_abs, tag = 'smem constant byte address 0x4 - core index']
  #allocation1 [shape = 'u32[144,128]{1,0:T(1,128)}', space=vmem, size = 0x12000, scoped, tag = 'internal scratch']
  %s0 = inlined_call_operand.vmem [shape: bf16[2,2,36,64], index: 0, kind: input, shape index: {}]
  %s1 = inlined_call_operand.vmem [shape: bf16[8,36], index: 1, kind: input, shape index: {}]
  %s2 = inlined_call_operand.vmem [shape: f32[8,1], index: 2, kind: input, shape index: {}]
  %s3 = inlined_call_operand.vmem [shape: bf16[4,8], index: 3, kind: input, shape index: {}]
  %s4 = inlined_call_operand.vmem [shape: bf16[4,8], index: 4, kind: input, shape index: {}]
  %s5 = inlined_call_operand.vmem [shape: f32[4,1], index: 5, kind: input, shape index: {}]
  %s6 = inlined_call_operand.vmem [shape: bf16[2,4,64], index: 6, kind: output, shape index: {}]
  %s7 = sld [smem:[#allocation0]]
  $region57: #{deeplab_change_detection_forward.2} parent=0
    _
  %s9 = ssub.s32 1, %s7
  %s10 = scalar_select 0, %s9, %s7
  loop: start=0, step=1, limit=4
  $region2: #{deeplab_change_detection_forward.2} parent=0 // loop_pre_header
    _
  $region3: #{deeplab_change_detection_forward.2} parent=0 // loop_header
    %s12 = sphi 0, %s16
    %p13 = scmp.ge.s32.totalorder %s12, 4
    %s19 = sphi 0, %s31
    %s20 = sphi 0, %s27
    %s21 = sphi 0, %s19
    %s22 = sphi 0, %s20
    %s23 = sphi 0, %s21
    %s24 = sphi 0, %s22
    %s36 = sphi 0, %s38
    %s39 = sphi 0, %s36
    %s40 = sphi 0, %s39
    %s56 = sphi 0, %s40
    %s60 = sphi 0, %s60
    %s62 = sphi 0, %s60
    %s63 = sphi 0, %s62
    %s77 = sphi 0, %s63
    %s81 = sphi 0, %s81
    %s83 = sphi 0, %s81
    %s84 = sphi 0, %s83
    %s98 = sphi 0, %s84
    %s102 = sphi 0, %s102
    %s104 = sphi 0, %s102
    %s105 = sphi 0, %s104
    %s119 = sphi 0, %s105
    %s123 = sphi 0, %s123
    %s125 = sphi 0, %s123
    %s126 = sphi 0, %s125
    %s140 = sphi 0, %s126
    %s144 = sphi 0, %s144
    %s146 = sphi 0, %s144
    %s147 = sphi 0, %s146
    %s161 = sphi 0, %s147
    %s169 = sphi 0, %s171
    %s172 = sphi 0, %s169
    %s173 = sphi 0, %s172
    %s189 = sphi 0, %s173
  $region4: #{deeplab_change_detection_forward.2} parent=0 // loop_header_branch
    %15 = sbr.rel (%p13) target = $region8
  $region5: #{deeplab_change_detection_forward.2} parent=0 // loop_body
    %s17 = ssub.s32 %s12, 1
    %s18 = ssub.s32 %s12, 2
    %s25 = sadd.s32 1, %s20
    %p26 = scmp.ge.s32.totalorder %s25, 1
    %s27 = scalar_select %p26, 0, %s25
    %s28 = sadd.s32 1, %s19
    %s29 = scalar_select %p26, %s28, %s19
    %p30 = scmp.ge.s32.totalorder %s29, 2
    %s31 = scalar_select %p30, 0, %s29
    %s32 = ssub.s32 %s19, %s31
    %s33 = ssub.s32 %s20, %s27
    %s34 = sor.u32 %s32, %s33
    %p35 = scmp.eq.s32.totalorder %s34, 0
    %s37 = sadd.s32 %s36, 1
    %s38 = scalar_select %p35, %s36, %s37
    %p41 = pneg %p35
    %p42 = scmp.eq.s32.totalorder %s12, 1
    %p43 = por %p41, %p42
    %p44 = scmp.ne.s32.totalorder %s36, %s39
    %p45 = scmp.eq.s32.totalorder %s12, 0
    %p46 = por %p44, %p45
    %p47 = scmp.ne.s32.totalorder %s36, %s39
    %p48 = scmp.eq.s32.totalorder %s17, 1
    %p49 = por %p47, %p48
    %p50 = scmp.ne.s32.totalorder %s39, %s40
    %p51 = scmp.eq.s32.totalorder %s17, 0
    %p52 = por %p50, %p51
    %p53 = scmp.ne.s32.totalorder %s39, %s40
    %p54 = scmp.eq.s32.totalorder %s18, 1
    %p55 = por %p53, %p54
    %p57 = scmp.ne.s32.totalorder %s40, %s56
    %p58 = scmp.eq.s32.totalorder %s18, 0
    %p59 = por %p57, %p58
    %s61 = sadd.s32 %s60, 1
    %p64 = scmp.eq.s32.totalorder %s12, 1
    %p65 = scmp.ne.s32.totalorder %s60, %s62
    %p66 = scmp.eq.s32.totalorder %s12, 0
    %p67 = por %p65, %p66
    %p68 = scmp.ne.s32.totalorder %s60, %s62
    %p69 = scmp.eq.s32.totalorder %s17, 1
    %p70 = por %p68, %p69
    %p71 = scmp.ne.s32.totalorder %s62, %s63
    %p72 = scmp.eq.s32.totalorder %s17, 0
    %p73 = por %p71, %p72
    %p74 = scmp.ne.s32.totalorder %s62, %s63
    %p75 = scmp.eq.s32.totalorder %s18, 1
    %p76 = por %p74, %p75
    %p78 = scmp.ne.s32.totalorder %s63, %s77
    %p79 = scmp.eq.s32.totalorder %s18, 0
    %p80 = por %p78, %p79
    %s82 = sadd.s32 %s81, 1
    %p85 = scmp.eq.s32.totalorder %s12, 1
    %p86 = scmp.ne.s32.totalorder %s81, %s83
    %p87 = scmp.eq.s32.totalorder %s12, 0
    %p88 = por %p86, %p87
    %p89 = scmp.ne.s32.totalorder %s81, %s83
    %p90 = scmp.eq.s32.totalorder %s17, 1
    %p91 = por %p89, %p90
    %p92 = scmp.ne.s32.totalorder %s83, %s84
    %p93 = scmp.eq.s32.totalorder %s17, 0
    %p94 = por %p92, %p93
    %p95 = scmp.ne.s32.totalorder %s83, %s84
    %p96 = scmp.eq.s32.totalorder %s18, 1
    %p97 = por %p95, %p96
    %p99 = scmp.ne.s32.totalorder %s84, %s98
    %p100 = scmp.eq.s32.totalorder %s18, 0
    %p101 = por %p99, %p100
    %s103 = sadd.s32 %s102, 1
    %p106 = scmp.eq.s32.totalorder %s12, 1
    %p107 = scmp.ne.s32.totalorder %s102, %s104
    %p108 = scmp.eq.s32.totalorder %s12, 0
    %p109 = por %p107, %p108
    %p110 = scmp.ne.s32.totalorder %s102, %s104
    %p111 = scmp.eq.s32.totalorder %s17, 1
    %p112 = por %p110, %p111
    %p113 = scmp.ne.s32.totalorder %s104, %s105
    %p114 = scmp.eq.s32.totalorder %s17, 0
    %p115 = por %p113, %p114
    %p116 = scmp.ne.s32.totalorder %s104, %s105
    %p117 = scmp.eq.s32.totalorder %s18, 1
    %p118 = por %p116, %p117
    %p120 = scmp.ne.s32.totalorder %s105, %s119
    %p121 = scmp.eq.s32.totalorder %s18, 0
    %p122 = por %p120, %p121
    %s124 = sadd.s32 %s123, 1
    %p127 = scmp.eq.s32.totalorder %s12, 1
    %p128 = scmp.ne.s32.totalorder %s123, %s125
    %p129 = scmp.eq.s32.totalorder %s12, 0
    %p130 = por %p128, %p129
    %p131 = scmp.ne.s32.totalorder %s123, %s125
    %p132 = scmp.eq.s32.totalorder %s17, 1
    %p133 = por %p131, %p132
    %p134 = scmp.ne.s32.totalorder %s125, %s126
    %p135 = scmp.eq.s32.totalorder %s17, 0
    %p136 = por %p134, %p135
    %p137 = scmp.ne.s32.totalorder %s125, %s126
    %p138 = scmp.eq.s32.totalorder %s18, 1
    %p139 = por %p137, %p138
    %p141 = scmp.ne.s32.totalorder %s126, %s140
    %p142 = scmp.eq.s32.totalorder %s18, 0
    %p143 = por %p141, %p142
    %s145 = sadd.s32 %s144, 1
    %p148 = scmp.eq.s32.totalorder %s12, 1
    %p149 = scmp.ne.s32.totalorder %s144, %s146
    %p150 = scmp.eq.s32.totalorder %s12, 0
    %p151 = por %p149, %p150
    %p152 = scmp.ne.s32.totalorder %s144, %s146
    %p153 = scmp.eq.s32.totalorder %s17, 1
    %p154 = por %p152, %p153
    %p155 = scmp.ne.s32.totalorder %s146, %s147
    %p156 = scmp.eq.s32.totalorder %s17, 0
    %p157 = por %p155, %p156
    %p158 = scmp.ne.s32.totalorder %s146, %s147
    %p159 = scmp.eq.s32.totalorder %s18, 1
    %p160 = por %p158, %p159
    %p162 = scmp.ne.s32.totalorder %s147, %s161
    %p163 = scmp.eq.s32.totalorder %s18, 0
    %p164 = por %p162, %p163
    %s165 = ssub.s32 %s19, %s31
    %s166 = ssub.s32 %s20, %s27
    %s167 = sor.u32 %s165, %s166
    %p168 = scmp.eq.s32.totalorder %s167, 0
    %s170 = sadd.s32 %s169, 1
    %s171 = scalar_select %p168, %s169, %s170
    %p174 = pneg %p168
    %p175 = scmp.eq.s32.totalorder %s12, 1
    %p176 = por %p174, %p175
    %p177 = scmp.ne.s32.totalorder %s169, %s172
    %p178 = scmp.eq.s32.totalorder %s12, 0
    %p179 = por %p177, %p178
    %p180 = scmp.ne.s32.totalorder %s169, %s172
    %p181 = scmp.eq.s32.totalorder %s17, 1
    %p182 = por %p180, %p181
    %p183 = scmp.ne.s32.totalorder %s172, %s173
    %p184 = scmp.eq.s32.totalorder %s17, 0
    %p185 = por %p183, %p184
    %p186 = scmp.ne.s32.totalorder %s172, %s173
    %p187 = scmp.eq.s32.totalorder %s18, 1
    %p188 = por %p186, %p187
    %p190 = scmp.ne.s32.totalorder %s173, %s189
    %p191 = scmp.eq.s32.totalorder %s18, 0
    %p192 = por %p190, %p191
    %p193 = scmp.le.s32.totalorder 1, %s12
    %p194 = scmp.lt.s32.totalorder %s12, 3
    %p195 = pnand %p193, %p194
    %p196 = pneg %p195
    // Predicated region
    $region9: #{deeplab_change_detection_forward.2} parent=5 // pred_check
      _
    $region10: #{deeplab_change_detection_forward.2} parent=5 // pred_check_branch
      %198 = sbr.rel (%p195) target = $region12
    $region11: #{deeplab_change_detection_forward.2} parent=5 // pred_region
      %s199 = ssub.s32 %s12, 1
      // Predicated region
      $region13: #{deeplab_change_detection_forward.2} parent=11 // pred_check
        %p200 = pneg %p73
      $region14: #{deeplab_change_detection_forward.2} parent=11 // pred_check_branch
        %202 = sbr.rel (%p200) target = $region16
      $region15: #{deeplab_change_detection_forward.2} parent=11 // pred_region
        _
      $region16: #{deeplab_change_detection_forward.2} parent=11 // pred_fallthru
        _
      // Predicated region
      $region17: #{deeplab_change_detection_forward.2} parent=11 // pred_check
        %p203 = pneg %p94
      $region18: #{deeplab_change_detection_forward.2} parent=11 // pred_check_branch
        %205 = sbr.rel (%p203) target = $region20
      $region19: #{deeplab_change_detection_forward.2} parent=11 // pred_region
        _
      $region20: #{deeplab_change_detection_forward.2} parent=11 // pred_fallthru
        _
      // Predicated region
      $region21: #{deeplab_change_detection_forward.2} parent=11 // pred_check
        %p206 = pneg %p115
      $region22: #{deeplab_change_detection_forward.2} parent=11 // pred_check_branch
        %208 = sbr.rel (%p206) target = $region24
      $region23: #{deeplab_change_detection_forward.2} parent=11 // pred_region
        _
      $region24: #{deeplab_change_detection_forward.2} parent=11 // pred_fallthru
        _
      // Predicated region
      $region25: #{deeplab_change_detection_forward.2} parent=11 // pred_check
        %p209 = pneg %p136
      $region26: #{deeplab_change_detection_forward.2} parent=11 // pred_check_branch
        %211 = sbr.rel (%p209) target = $region28
      $region27: #{deeplab_change_detection_forward.2} parent=11 // pred_region
        _
      $region28: #{deeplab_change_detection_forward.2} parent=11 // pred_fallthru
        _
      // Predicated region
      $region29: #{deeplab_change_detection_forward.2} parent=11 // pred_check
        %p212 = pneg %p157
      $region30: #{deeplab_change_detection_forward.2} parent=11 // pred_check_branch
        %214 = sbr.rel (%p212) target = $region32
      $region31: #{deeplab_change_detection_forward.2} parent=11 // pred_region
        _
      $region32: #{deeplab_change_detection_forward.2} parent=11 // pred_fallthru
        _
    $region12: #{deeplab_change_detection_forward.2} parent=5 // pred_fallthru
      _
    %p215 = scmp.lt.s32.totalorder %s12, 2
    // Predicated region
    $region33: #{deeplab_change_detection_forward.2} parent=5 // pred_check
      %p216 = pneg %p215
    $region34: #{deeplab_change_detection_forward.2} parent=5 // pred_check_branch
      %218 = sbr.rel (%p216) target = $region36
    $region35: #{deeplab_change_detection_forward.2} parent=5 // pred_region
      // Predicated region
      $region37: #{deeplab_change_detection_forward.2} parent=35 // pred_check
        %p219 = pneg %p46
      $region38: #{deeplab_change_detection_forward.2} parent=35 // pred_check_branch
        %221 = sbr.rel (%p219) target = $region40
      $region39: #{deeplab_change_detection_forward.2} parent=35 // pred_region
        %p222 = scmp.lt.s32.totalorder %s19, 1
        %s223 = scalar_select %p222, %s19, 1
        %p224 = scmp.lt.s32.totalorder %s20, 0
        %s225 = scalar_select %p224, %s20, 0
        %s226 = smul.addr %s223, 10
        %s227 = sadd.s32 %s225, %s226
        %s228 = smul.addr %s227, 4
        %s229 = scalar_lea.vmem %s0, %s228
      $region40: #{deeplab_change_detection_forward.2} parent=35 // pred_fallthru
        _
    $region36: #{deeplab_change_detection_forward.2} parent=5 // pred_fallthru
      _
    %p230 = scmp.le.s32.totalorder 1, %s12
    %p231 = scmp.lt.s32.totalorder %s12, 3
    %p232 = pnand %p230, %p231
    %p233 = pneg %p232
    // Predicated region
    $region41: #{deeplab_change_detection_forward.2} parent=5 // pred_check
      _
    $region42: #{deeplab_change_detection_forward.2} parent=5 // pred_check_branch
      %235 = sbr.rel (%p232) target = $region44
    $region43: #{deeplab_change_detection_forward.2} parent=5 // pred_region
      %s236 = ssub.s32 %s12, 1
      %p237 = scmp.lt.s32.totalorder %s21, 1
      %s238 = scalar_select %p237, %s21, 1
      %p239 = scmp.lt.s32.totalorder %s22, 0
      %s240 = scalar_select %p239, %s22, 0
      %s241 = smul.addr %s238, 10
      %s242 = sadd.s32 %s240, %s241
      %s243 = smul.addr %s242, 4
      %s244 = scalar_lea.vmem %s0, %s243
      %p245 = pneg %p52
      %p246 = pneg %p49
      %p247 = pneg %p73
      %p248 = pneg %p70
      %p249 = pneg %p94
      %p250 = pneg %p91
      %p251 = pneg %p115
      %p252 = pneg %p112
      %p253 = pneg %p136
      %p254 = pneg %p133
      %p255 = pneg %p157
      %p256 = pneg %p154
      %p257 = pneg %p185
      %p258 = pneg %p182
      %p259 = scmp.lt.s32.totalorder %s21, 1
      %s260 = scalar_select %p259, %s21, 1
      %p261 = scmp.lt.s32.totalorder %s22, 0
      %s262 = scalar_select %p261, %s22, 0
      %s263 = sadd.s32 %s262, %s260
      %s264 = smul.addr %s263, 2
      %s265 = scalar_lea.vmem %s6, %s264
      %p266 = scmp.lt.s32.totalorder %s21, 1
      %s267 = scalar_select %p266, %s21, 1
      %p268 = scmp.lt.s32.totalorder %s22, 0
      %s269 = scalar_select %p268, %s22, 0
      %s270 = smul.addr %s267, 10
      %s271 = sadd.s32 %s269, %s270
      %s272 = smul.addr %s271, 4
      %s273 = scalar_lea.vmem %s0, %s272
      %p274 = scmp.lt.s32.totalorder %s21, 1
      %s275 = scalar_select %p274, %s21, 1
      %p276 = scmp.lt.s32.totalorder %s22, 0
      %s277 = scalar_select %p276, %s22, 0
      %s278 = sadd.s32 %s277, %s275
      %s279 = smul.addr %s278, 2
      %s280 = scalar_lea.vmem %s6, %s279
      %v282 = vld [vmem:[%s1] sm:$0xf]
      %v283 = vld [vmem:[%s2] sm:$0xff]
      %v284 = vld [vmem:[%s273] sm:$0xf]
      %v285 = vld [vmem:[%s273 + $0x4] sm:$0xf]
      %v286 = vld [vmem:[%s273 + $0x8] sm:$0xf]
      %v287 = vld [vmem:[%s273 + $0xc] sm:$0xf]
      %v288 = vld [vmem:[%s273 + $0x10] sm:$0x3]
      %290 = vset.pattern.permute.xlu0 0
      %291 = vperm.xlu0 %290, %v283
      %v292 = vpop.permute.xlu0 %291
      %v299 = vunpack.c.l.b16 %v284
      %v300 = vunpack.c.l.b16 %v285
      %v301 = vunpack.c.l.b16 %v286
      %v302 = vunpack.c.l.b16 %v287
      %v303 = vunpack.c.l.b16 %v288
      %v304 = vpack.c.b16 %v300, %v299
      %v305 = vpack.c.b16 %v302, %v301
      %v306 = vpack.c.b16 %v303, %v303
      %vm309 = vcmask 293888
      %v311 = vsel %vm309, %v282, 0
      %vm313 = vcmask 1041408
      %v315 = vsel %vm313, %v306, 0
      %317 = vmatprep.subr.bf16.mxu0 0
      %318 = vmatpush1.bf16.msra.mxu0 0
      %319 = vmatprep.subr.bf16.mxu0 0
      %320 = vmatpush1.bf16.msra.mxu0 0
      %321 = vmatprep.subr.bf16.mxu0 0
      %322 = vmatpush1.bf16.msra.mxu0 0
      %323 = vmatprep.subr.bf16.mxu0 0
      %324 = vmatpush1.bf16.msra.mxu0 0
      %325 = vmatprep.subr.bf16.mxu0 0
      %326 = vmatpush1.bf16.msra.mxu0 0
      %327 = vmatprep.subr.bf16.mxu0 0
      %328 = vmatpush1.bf16.msra.mxu0 %v315
      %329 = vmatprep.subr.bf16.mxu0 0
      %330 = vmatpush1.bf16.msra.mxu0 %v305
      %331 = vmatprep.subr.bf16.mxu0 0
      %332 = vmatpush1.bf16.msra.mxu0 %v304
      %333 = vmatprep.subr.bf16.mxu0 0
      %334 = vmatpush2.bf16.msra.mxu0 0
      %335 = vmatprep.subr.bf16.mxu0 0
      %336 = vmatpush2.bf16.msra.mxu0 0
      %337 = vmatprep.subr.bf16.mxu0 0
      %338 = vmatpush2.bf16.msra.mxu0 0
      %339 = vmatprep.subr.bf16.mxu0 0
      %340 = vmatpush2.bf16.msra.mxu0 0
      %341 = vmatprep.subr.bf16.mxu0 0
      %342 = vmatpush2.bf16.msra.mxu0 0
      %343 = vmatprep.subr.bf16.mxu0 0
      %344 = vmatpush2.bf16.msra.mxu0 0
      %345 = vmatprep.subr.bf16.mxu0 0
      %346 = vmatpush2.bf16.msra.mxu0 0
      %347 = vmatprep.subr.bf16.mxu0 0
      %348 = vmatpush2.bf16.msra.mxu0 0
      %349 = vmatprep.mubr.bf16.mxu0 0
      %350 = vmatmul.mubr.bf16.gmra.mxu0 %v311
      %v351 = vpop.f32.mrf.mxu0
      %v352 = vadd.f32 %v292, %v351
      %v353 = vpop.f32.mrf.mxu0
      %v354 = vpop.f32.mrf.mxu0
      %v355 = vpop.f32.mrf.mxu0
      %356 = vdwg.mxu0
      %v357 = vmax.f32 %v352, 0.0
      %v358 = vpack.c.bf16 %v357, %v357
      %s359 = scalar_lea.vmem %s273, 20
      %v360 = vld [vmem:[%s359] sm:$0xf]
      %v361 = vld [vmem:[%s359 + $0x4] sm:$0xf]
      %v362 = vld [vmem:[%s359 + $0x8] sm:$0xf]
      %v363 = vld [vmem:[%s359 + $0xc] sm:$0xf]
      %v364 = vld [vmem:[%s359 + $0x10] sm:$0x3]
      %v370 = vunpack.c.l.b16 %v360
      %v371 = vunpack.c.l.b16 %v361
      %v372 = vunpack.c.l.b16 %v362
      %v373 = vunpack.c.l.b16 %v363
      %v374 = vunpack.c.l.b16 %v364
      %v375 = vpack.c.b16 %v371, %v370
      %v376 = vpack.c.b16 %v373, %v372
      %v377 = vpack.c.b16 %v374, %v374
      %v381 = vsel %vm313, %v377, 0
      %383 = vmatprep.subr.bf16.mxu0 0
      %384 = vmatpush1.bf16.msra.mxu0 0
      %385 = vmatprep.subr.bf16.mxu0 0
      %386 = vmatpush1.bf16.msra.mxu0 0
      %387 = vmatprep.subr.bf16.mxu0 0
      %388 = vmatpush1.bf16.msra.mxu0 0
      %389 = vmatprep.subr.bf16.mxu0 0
      %390 = vmatpush1.bf16.msra.mxu0 0
      %391 = vmatprep.subr.bf16.mxu0 0
      %392 = vmatpush1.bf16.msra.mxu0 0
      %393 = vmatprep.subr.bf16.mxu0 0
      %394 = vmatpush1.bf16.msra.mxu0 %v381
      %395 = vmatprep.subr.bf16.mxu0 0
      %396 = vmatpush1.bf16.msra.mxu0 %v376
      %397 = vmatprep.subr.bf16.mxu0 0
      %398 = vmatpush1.bf16.msra.mxu0 %v375
      %399 = vmatprep.subr.bf16.mxu0 0
      %400 = vmatpush2.bf16.msra.mxu0 0
      %401 = vmatprep.subr.bf16.mxu0 0
      %402 = vmatpush2.bf16.msra.mxu0 0
      %403 = vmatprep.subr.bf16.mxu0 0
      %404 = vmatpush2.bf16.msra.mxu0 0
      %405 = vmatprep.subr.bf16.mxu0 0
      %406 = vmatpush2.bf16.msra.mxu0 0
      %407 = vmatprep.subr.bf16.mxu0 0
      %408 = vmatpush2.bf16.msra.mxu0 0
      %409 = vmatprep.subr.bf16.mxu0 0
      %410 = vmatpush2.bf16.msra.mxu0 0
      %411 = vmatprep.subr.bf16.mxu0 0
      %412 = vmatpush2.bf16.msra.mxu0 0
      %413 = vmatprep.subr.bf16.mxu0 0
      %414 = vmatpush2.bf16.msra.mxu0 0
      %415 = vmatprep.mubr.bf16.mxu0 0
      %416 = vmatmul.mubr.bf16.gmra.mxu0 %v311
      %v417 = vpop.f32.mrf.mxu0
      %v418 = vadd.f32 %v292, %v417
      %v419 = vpop.f32.mrf.mxu0
      %v420 = vpop.f32.mrf.mxu0
      %v421 = vpop.f32.mrf.mxu0
      %422 = vdwg.mxu0
      %v423 = vmax.f32 %v418, 0.0
      %v424 = vpack.c.bf16 %v423, %v423
      %v425 = vld [vmem:[%s3] sm:$0x3]
      %v426 = vld [vmem:[%s4] sm:$0x3]
      %vm427 = vcmask 64512
      %v429 = vsel %vm427, %v426, 0
      %vm431 = vcmask 1043456
      %v433 = vsel %vm431, %v424, 0
      %435 = vmatprep.subr.bf16.mxu0 0
      %436 = vmatpush1.bf16.msra.mxu0 0
      %437 = vmatprep.subr.bf16.mxu0 0
      %438 = vmatpush1.bf16.msra.mxu0 0
      %439 = vmatprep.subr.bf16.mxu0 0
      %440 = vmatpush1.bf16.msra.mxu0 0
      %441 = vmatprep.subr.bf16.mxu0 0
      %442 = vmatpush1.bf16.msra.mxu0 0
      %443 = vmatprep.subr.bf16.mxu0 0
      %444 = vmatpush1.bf16.msra.mxu0 0
      %445 = vmatprep.subr.bf16.mxu0 0
      %446 = vmatpush1.bf16.msra.mxu0 0
      %447 = vmatprep.subr.bf16.mxu0 0
      %448 = vmatpush1.bf16.msra.mxu0 0
      %449 = vmatprep.subr.bf16.mxu0 0
      %450 = vmatpush1.bf16.msra.mxu0 %v433
      %451 = vmatprep.subr.bf16.mxu0 0
      %452 = vmatpush2.bf16.msra.mxu0 0
      %453 = vmatprep.subr.bf16.mxu0 0
      %454 = vmatpush2.bf16.msra.mxu0 0
      %455 = vmatprep.subr.bf16.mxu0 0
      %456 = vmatpush2.bf16.msra.mxu0 0
      %457 = vmatprep.subr.bf16.mxu0 0
      %458 = vmatpush2.bf16.msra.mxu0 0
      %459 = vmatprep.subr.bf16.mxu0 0
      %460 = vmatpush2.bf16.msra.mxu0 0
      %461 = vmatprep.subr.bf16.mxu0 0
      %462 = vmatpush2.bf16.msra.mxu0 0
      %463 = vmatprep.subr.bf16.mxu0 0
      %464 = vmatpush2.bf16.msra.mxu0 0
      %465 = vmatprep.subr.bf16.mxu0 0
      %466 = vmatpush2.bf16.msra.mxu0 0
      %467 = vmatprep.mubr.bf16.mxu0 0
      %468 = vmatmul.mubr.bf16.gmra.mxu0 %v429
      %v469 = vpop.f32.mrf.mxu0
      %v470 = vadd.f32 0.0, %v469
      %v471 = vpop.f32.mrf.mxu0
      %v472 = vpop.f32.mrf.mxu0
      %v473 = vpop.f32.mrf.mxu0
      %474 = vdwg.mxu0
      %v476 = vsel %vm427, %v425, 0
      %v479 = vsel %vm431, %v358, 0
      %481 = vmatprep.subr.bf16.mxu0 0
      %482 = vmatpush1.bf16.msra.mxu0 0
      %483 = vmatprep.subr.bf16.mxu0 0
      %484 = vmatpush1.bf16.msra.mxu0 0
      %485 = vmatprep.subr.bf16.mxu0 0
      %486 = vmatpush1.bf16.msra.mxu0 0
      %487 = vmatprep.subr.bf16.mxu0 0
      %488 = vmatpush1.bf16.msra.mxu0 0
      %489 = vmatprep.subr.bf16.mxu0 0
      %490 = vmatpush1.bf16.msra.mxu0 0
      %491 = vmatprep.subr.bf16.mxu0 0
      %492 = vmatpush1.bf16.msra.mxu0 0
      %493 = vmatprep.subr.bf16.mxu0 0
      %494 = vmatpush1.bf16.msra.mxu0 0
      %495 = vmatprep.subr.bf16.mxu0 0
      %496 = vmatpush1.bf16.msra.mxu0 %v479
      %497 = vmatprep.subr.bf16.mxu0 0
      %498 = vmatpush2.bf16.msra.mxu0 0
      %499 = vmatprep.subr.bf16.mxu0 0
      %500 = vmatpush2.bf16.msra.mxu0 0
      %501 = vmatprep.subr.bf16.mxu0 0
      %502 = vmatpush2.bf16.msra.mxu0 0
      %503 = vmatprep.subr.bf16.mxu0 0
      %504 = vmatpush2.bf16.msra.mxu0 0
      %505 = vmatprep.subr.bf16.mxu0 0
      %506 = vmatpush2.bf16.msra.mxu0 0
      %507 = vmatprep.subr.bf16.mxu0 0
      %508 = vmatpush2.bf16.msra.mxu0 0
      %509 = vmatprep.subr.bf16.mxu0 0
      %510 = vmatpush2.bf16.msra.mxu0 0
      %511 = vmatprep.subr.bf16.mxu0 0
      %512 = vmatpush2.bf16.msra.mxu0 0
      %513 = vmatprep.mubr.bf16.mxu0 0
      %514 = vmatmul.mubr.bf16.gmra.mxu0 %v476
      %v515 = vpop.f32.mrf.mxu0
      %v516 = vadd.f32 %v470, %v515
      %v517 = vpop.f32.mrf.mxu0
      %v518 = vpop.f32.mrf.mxu0
      %v519 = vpop.f32.mrf.mxu0
      %520 = vdwg.mxu0
      %v521 = vld [vmem:[%s5] sm:$0xf]
      %523 = vset.pattern.permute.xlu0 0
      %524 = vperm.xlu0 %523, %v521
      %v525 = vpop.permute.xlu0 %524
      %v527 = vadd.f32 %v516, %v525
      %v528 = vpack.c.bf16 %v527, %v527
      %vm529 = vcmask 517120
      %530 = vst.msk [vmem:[%s280] sm:$0x3] %vm529, %v528
      %p531 = scmp.lt.s32.totalorder %s21, 1
      %s532 = scalar_select %p531, %s21, 1
      %p533 = scmp.lt.s32.totalorder %s22, 0
      %s534 = scalar_select %p533, %s22, 0
      %s535 = sadd.s32 %s534, %s532
      %s536 = smul.addr %s535, 2
      %s537 = scalar_lea.vmem %s6, %s536
      // Predicated region
      $region45: #{deeplab_change_detection_forward.2} parent=43 // pred_check
        %p538 = pneg %p182
      $region46: #{deeplab_change_detection_forward.2} parent=43 // pred_check_branch
        %540 = sbr.rel (%p538) target = $region48
      $region47: #{deeplab_change_detection_forward.2} parent=43 // pred_region
        _
      $region48: #{deeplab_change_detection_forward.2} parent=43 // pred_fallthru
        _
    $region44: #{deeplab_change_detection_forward.2} parent=5 // pred_fallthru
      _
    %p541 = scmp.le.s32.totalorder 2, %s12
    // Predicated region
    $region49: #{deeplab_change_detection_forward.2} parent=5 // pred_check
      %p542 = pneg %p541
    $region50: #{deeplab_change_detection_forward.2} parent=5 // pred_check_branch
      %544 = sbr.rel (%p542) target = $region52
    $region51: #{deeplab_change_detection_forward.2} parent=5 // pred_region
      %s545 = ssub.s32 %s12, 2
      // Predicated region
      $region53: #{deeplab_change_detection_forward.2} parent=51 // pred_check
        %p546 = pneg %p188
      $region54: #{deeplab_change_detection_forward.2} parent=51 // pred_check_branch
        %548 = sbr.rel (%p546) target = $region56
      $region55: #{deeplab_change_detection_forward.2} parent=51 // pred_region
        %p549 = scmp.lt.s32.totalorder %s23, 1
        %s550 = scalar_select %p549, %s23, 1
        %p551 = scmp.lt.s32.totalorder %s24, 0
        %s552 = scalar_select %p551, %s24, 0
        %s553 = sadd.s32 %s552, %s550
        %s554 = smul.addr %s553, 2
        %s555 = scalar_lea.vmem %s6, %s554
      $region56: #{deeplab_change_detection_forward.2} parent=51 // pred_fallthru
        _
    $region52: #{deeplab_change_detection_forward.2} parent=5 // pred_fallthru
      _
  $region6: #{deeplab_change_detection_forward.2} parent=0 // loop_footer
    %s16 = sadd.s32 1, %s12
  $region7: #{deeplab_change_detection_forward.2} parent=0 // loop_footer_branch
    %11 = sbr.rel target = $region3
  $region8: #{deeplab_change_detection_forward.2} parent=0 // loop_exit
    _

// kernel: deeplab_change_detection_forward.3
$region0: #{deeplab_change_detection_forward.3}
  #allocation0 [shape = 'u32[]', space=smem, size = 0x4, offset = 0x4, fixed_abs, tag = 'smem constant byte address 0x4 - core index']
  #allocation1 [shape = 'u32[144,128]{1,0:T(1,128)}', space=vmem, size = 0x12000, scoped, tag = 'internal scratch']
  %s0 = inlined_call_operand.vmem [shape: bf16[8,8,8], index: 0, kind: input, shape index: {}]
  %s1 = inlined_call_operand.vmem [shape: bf16[16,8], index: 1, kind: input, shape index: {}]
  %s2 = inlined_call_operand.vmem [shape: bf16[8,16], index: 2, kind: input, shape index: {}]
  %s3 = inlined_call_operand.hbm [shape: f32[8,16,16], index: 3, kind: output, shape index: {}]
  %s4 = sld [smem:[#allocation0]]
  $region45: #{deeplab_change_detection_forward.3} parent=0
    _
  %s6 = ssub.s32 1, %s4
  %s7 = scalar_select 0, %s6, %s4
  $region1: #{deeplab_change_detection_forward.3} parent=0
    #allocation2 [shape = 'u8[65536]{0}', space=vmem, size = 0x10000, scoped, tag = 'output window, operand 0']
    #allocation3 [shape = 's32[2]{0}', space=sflag, size = 0x8, scoped, tag = 'scoped memory for deeplab_change_detection_forward.3']
    %8 = vsyncpa [#allocation3], 0
    %s9 = scalar_lea.sflag [#allocation3], 1
    %10 = vsyncpa %s9, 0
    loop: start=0, step=1, limit=4
    $region2: #{deeplab_change_detection_forward.3} parent=1 // loop_pre_header
      _
    $region3: #{deeplab_change_detection_forward.3} parent=1 // loop_header
      %s12 = sphi 0, %s16
      %p13 = scmp.ge.s32.totalorder %s12, 4
      %s22 = sphi 0, %s24
      %s25 = sphi 0, %s22
      %s26 = sphi 0, %s25
      %s42 = sphi 0, %s26
      %s46 = sphi 0, %s46
      %s48 = sphi 0, %s46
      %s49 = sphi 0, %s48
      %s63 = sphi 0, %s49
      %s67 = sphi 0, %s67
      %s69 = sphi 0, %s67
      %s70 = sphi 0, %s69
      %s84 = sphi 0, %s70
      %s90 = sphi 0, %s92
      %s93 = sphi 0, %s90
      %s94 = sphi 0, %s93
      %s110 = sphi 0, %s94
    $region4: #{deeplab_change_detection_forward.3} parent=1 // loop_header_branch
      %15 = sbr.rel (%p13) target = $region8
    $region5: #{deeplab_change_detection_forward.3} parent=1 // loop_body
      %s17 = ssub.s32 %s12, 1
      %s18 = ssub.s32 %s12, 2
      %s19 = sadd.s32 %s12, 1
      %s20 = ssub.s32 %s12, %s19
      %p21 = scmp.eq.s32.totalorder %s20, 0
      %s23 = sadd.s32 %s22, 1
      %s24 = scalar_select %p21, %s22, %s23
      %p27 = pneg %p21
      %p28 = scmp.eq.s32.totalorder %s12, 1
      %p29 = por %p27, %p28
      %p30 = scmp.ne.s32.totalorder %s22, %s25
      %p31 = scmp.eq.s32.totalorder %s12, 0
      %p32 = por %p30, %p31
      %p33 = scmp.ne.s32.totalorder %s22, %s25
      %p34 = scmp.eq.s32.totalorder %s17, 1
      %p35 = por %p33, %p34
      %p36 = scmp.ne.s32.totalorder %s25, %s26
      %p37 = scmp.eq.s32.totalorder %s17, 0
      %p38 = por %p36, %p37
      %p39 = scmp.ne.s32.totalorder %s25, %s26
      %p40 = scmp.eq.s32.totalorder %s18, 1
      %p41 = por %p39, %p40
      %p43 = scmp.ne.s32.totalorder %s26, %s42
      %p44 = scmp.eq.s32.totalorder %s18, 0
      %p45 = por %p43, %p44
      %s47 = sadd.s32 %s46, 1
      %p50 = scmp.eq.s32.totalorder %s12, 1
      %p51 = scmp.ne.s32.totalorder %s46, %s48
      %p52 = scmp.eq.s32.totalorder %s12, 0
      %p53 = por %p51, %p52
      %p54 = scmp.ne.s32.totalorder %s46, %s48
      %p55 = scmp.eq.s32.totalorder %s17, 1
      %p56 = por %p54, %p55
      %p57 = scmp.ne.s32.totalorder %s48, %s49
      %p58 = scmp.eq.s32.totalorder %s17, 0
      %p59 = por %p57, %p58
      %p60 = scmp.ne.s32.totalorder %s48, %s49
      %p61 = scmp.eq.s32.totalorder %s18, 1
      %p62 = por %p60, %p61
      %p64 = scmp.ne.s32.totalorder %s49, %s63
      %p65 = scmp.eq.s32.totalorder %s18, 0
      %p66 = por %p64, %p65
      %s68 = sadd.s32 %s67, 1
      %p71 = scmp.eq.s32.totalorder %s12, 1
      %p72 = scmp.ne.s32.totalorder %s67, %s69
      %p73 = scmp.eq.s32.totalorder %s12, 0
      %p74 = por %p72, %p73
      %p75 = scmp.ne.s32.totalorder %s67, %s69
      %p76 = scmp.eq.s32.totalorder %s17, 1
      %p77 = por %p75, %p76
      %p78 = scmp.ne.s32.totalorder %s69, %s70
      %p79 = scmp.eq.s32.totalorder %s17, 0
      %p80 = por %p78, %p79
      %p81 = scmp.ne.s32.totalorder %s69, %s70
      %p82 = scmp.eq.s32.totalorder %s18, 1
      %p83 = por %p81, %p82
      %p85 = scmp.ne.s32.totalorder %s70, %s84
      %p86 = scmp.eq.s32.totalorder %s18, 0
      %p87 = por %p85, %p86
      %s88 = ssub.s32 %s12, %s19
      %p89 = scmp.eq.s32.totalorder %s88, 0
      %s91 = sadd.s32 %s90, 1
      %s92 = scalar_select %p89, %s90, %s91
      %p95 = pneg %p89
      %p96 = scmp.eq.s32.totalorder %s12, 1
      %p97 = por %p95, %p96
      %p98 = scmp.ne.s32.totalorder %s90, %s93
      %p99 = scmp.eq.s32.totalorder %s12, 0
      %p100 = por %p98, %p99
      %p101 = scmp.ne.s32.totalorder %s90, %s93
      %p102 = scmp.eq.s32.totalorder %s17, 1
      %p103 = por %p101, %p102
      %p104 = scmp.ne.s32.totalorder %s93, %s94
      %p105 = scmp.eq.s32.totalorder %s17, 0
      %p106 = por %p104, %p105
      %p107 = scmp.ne.s32.totalorder %s93, %s94
      %p108 = scmp.eq.s32.totalorder %s18, 1
      %p109 = por %p107, %p108
      %p111 = scmp.ne.s32.totalorder %s94, %s110
      %p112 = scmp.eq.s32.totalorder %s18, 0
      %p113 = por %p111, %p112
      %p114 = scmp.le.s32.totalorder 1, %s12
      %p115 = scmp.lt.s32.totalorder %s12, 3
      %p116 = pnand %p114, %p115
      %p117 = pneg %p116
      // Predicated region
      $region9: #{deeplab_change_detection_forward.3} parent=5 // pred_check
        _
      $region10: #{deeplab_change_detection_forward.3} parent=5 // pred_check_branch
        %119 = sbr.rel (%p116) target = $region12
      $region11: #{deeplab_change_detection_forward.3} parent=5 // pred_region
        %s120 = ssub.s32 %s12, 1
        // Predicated region
        $region13: #{deeplab_change_detection_forward.3} parent=11 // pred_check
          %p121 = pneg %p59
        $region14: #{deeplab_change_detection_forward.3} parent=11 // pred_check_branch
          %123 = sbr.rel (%p121) target = $region16
        $region15: #{deeplab_change_detection_forward.3} parent=11 // pred_region
          _
        $region16: #{deeplab_change_detection_forward.3} parent=11 // pred_fallthru
          _
        // Predicated region
        $region17: #{deeplab_change_detection_forward.3} parent=11 // pred_check
          %p124 = pneg %p80
        $region18: #{deeplab_change_detection_forward.3} parent=11 // pred_check_branch
          %126 = sbr.rel (%p124) target = $region20
        $region19: #{deeplab_change_detection_forward.3} parent=11 // pred_region
          _
        $region20: #{deeplab_change_detection_forward.3} parent=11 // pred_fallthru
          _
      $region12: #{deeplab_change_detection_forward.3} parent=5 // pred_fallthru
        _
      %p127 = scmp.lt.s32.totalorder %s12, 2
      // Predicated region
      $region21: #{deeplab_change_detection_forward.3} parent=5 // pred_check
        %p128 = pneg %p127
      $region22: #{deeplab_change_detection_forward.3} parent=5 // pred_check_branch
        %130 = sbr.rel (%p128) target = $region24
      $region23: #{deeplab_change_detection_forward.3} parent=5 // pred_region
        // Predicated region
        $region25: #{deeplab_change_detection_forward.3} parent=23 // pred_check
          %p131 = pneg %p32
        $region26: #{deeplab_change_detection_forward.3} parent=23 // pred_check_branch
          %133 = sbr.rel (%p131) target = $region28
        $region27: #{deeplab_change_detection_forward.3} parent=23 // pred_region
          %s134 = smul.u32 4, %s12
          %p135 = scmp.lt.s32.totalorder %s134, 7
          %s136 = scalar_select %p135, %s134, 7
          %s137 = smul.addr %s136, 4
          %s138 = scalar_lea.vmem %s0, %s137
          %s139 = smul.u32 4, %s12
        $region28: #{deeplab_change_detection_forward.3} parent=23 // pred_fallthru
          _
      $region24: #{deeplab_change_detection_forward.3} parent=5 // pred_fallthru
        _
      %p140 = scmp.le.s32.totalorder 1, %s12
      %p141 = scmp.lt.s32.totalorder %s12, 3
      %p142 = pnand %p140, %p141
      %p143 = pneg %p142
      // Predicated region
      $region29: #{deeplab_change_detection_forward.3} parent=5 // pred_check
        _
      $region30: #{deeplab_change_detection_forward.3} parent=5 // pred_check_branch
        %145 = sbr.rel (%p142) target = $region32
      $region31: #{deeplab_change_detection_forward.3} parent=5 // pred_region
        %s146 = ssub.s32 %s12, 1
        %s147 = smul.u32 4, %s17
        %p148 = scmp.lt.s32.totalorder %s147, 7
        %s149 = scalar_select %p148, %s147, 7
        %s150 = smul.addr %s149, 4
        %s151 = scalar_lea.vmem %s0, %s150
        %p152 = pneg %p38
        %p153 = pneg %p35
        %p154 = pneg %p59
        %p155 = pneg %p56
        %p156 = pneg %p80
        %p157 = pneg %p77
        %p158 = pneg %p106
        %p159 = pneg %p103
        %s160 = sand.u32 %s93, 1
        %s161 = scalar_lea.sflag [#allocation3], %s160
        %s162 = sand.u32 %s93, 1
        %s163 = smul.addr %s162, 64
        %s164 = scalar_lea.vmem [#allocation2], %s163
        %s165 = smul.u32 4, %s17
        %p166 = scmp.lt.s32.totalorder %s165, 7
        %s167 = scalar_select %p166, %s165, 7
        %s168 = smul.addr %s167, 4
        %s169 = scalar_lea.vmem %s0, %s168
        %s170 = smul.u32 4, %s17
        %s171 = smul.u32 4, %s17
        %v173 = vld [vmem:[%s1] sm:$0xf]
        %v174 = vld [vmem:[%s1 + $0x4] sm:$0xf]
        %v175 = vld [vmem:[%s2] sm:$0xf]
        %v176 = vld [vmem:[%s169] sm:$0xf]
        %v179 = vunpack.c.l.b16 %v173
        %v180 = vunpack.c.l.b16 %v174
        %v181 = vpack.c.b16 %v180, %v179
        %vm182 = vcmask 64512
        %v184 = vsel %vm182, %v181, 0
        %vm186 = vcmask 1043456
        %v188 = vsel %vm186, %v176, 0
        %190 = vmatprep.subr.bf16.mxu0 0
        %191 = vmatpush1.bf16.msra.mxu0 0
        %192 = vmatprep.subr.bf16.mxu0 0
        %193 = vmatpush1.bf16.msra.mxu0 0
        %194 = vmatprep.subr.bf16.mxu0 0
        %195 = vmatpush1.bf16.msra.mxu0 0
        %196 = vmatprep.subr.bf16.mxu0 0
        %197 = vmatpush1.bf16.msra.mxu0 0
        %198 = vmatprep.subr.bf16.mxu0 0
        %199 = vmatpush1.bf16.msra.mxu0 0
        %200 = vmatprep.subr.bf16.mxu0 0
        %201 = vmatpush1.bf16.msra.mxu0 0
        %202 = vmatprep.subr.bf16.mxu0 0
        %203 = vmatpush1.bf16.msra.mxu0 0
        %204 = vmatprep.subr.bf16.mxu0 0
        %205 = vmatpush1.bf16.msra.mxu0 %v188
        %206 = vmatprep.subr.bf16.mxu0 0
        %207 = vmatpush2.bf16.msra.mxu0 0
        %208 = vmatprep.subr.bf16.mxu0 0
        %209 = vmatpush2.bf16.msra.mxu0 0
        %210 = vmatprep.subr.bf16.mxu0 0
        %211 = vmatpush2.bf16.msra.mxu0 0
        %212 = vmatprep.subr.bf16.mxu0 0
        %213 = vmatpush2.bf16.msra.mxu0 0
        %214 = vmatprep.subr.bf16.mxu0 0
        %215 = vmatpush2.bf16.msra.mxu0 0
        %216 = vmatprep.subr.bf16.mxu0 0
        %217 = vmatpush2.bf16.msra.mxu0 0
        %218 = vmatprep.subr.bf16.mxu0 0
        %219 = vmatpush2.bf16.msra.mxu0 0
        %220 = vmatprep.subr.bf16.mxu0 0
        %221 = vmatpush2.bf16.msra.mxu0 0
        %222 = vmatprep.mubr.bf16.mxu0 0
        %223 = vmatmul.mubr.bf16.gmra.mxu0 %v184
        %v224 = vpop.f32.mrf.mxu0
        %v225 = vadd.f32 0.0, %v224
        %v226 = vpop.f32.mrf.mxu0
        %v227 = vpop.f32.mrf.mxu0
        %v228 = vadd.f32 0.0, %v227
        %v229 = vpop.f32.mrf.mxu0
        %230 = vdwg.mxu0
        %v231 = vpack.c.bf16 %v228, %v225
        %v233 = vsel %vm182, %v231, 0
        %v236 = vsel %vm186, %v175, 0
        %238 = vmatprep.subr.bf16.mxu0 0
        %239 = vmatpush1.bf16.msra.mxu0 0
        %240 = vmatprep.subr.bf16.mxu0 0
        %241 = vmatpush1.bf16.msra.mxu0 0
        %242 = vmatprep.subr.bf16.mxu0 0
        %243 = vmatpush1.bf16.msra.mxu0 0
        %244 = vmatprep.subr.bf16.mxu0 0
        %245 = vmatpush1.bf16.msra.mxu0 0
        %246 = vmatprep.subr.bf16.mxu0 0
        %247 = vmatpush1.bf16.msra.mxu0 0
        %248 = vmatprep.subr.bf16.mxu0 0
        %249 = vmatpush1.bf16.msra.mxu0 0
        %250 = vmatprep.subr.bf16.mxu0 0
        %251 = vmatpush1.bf16.msra.mxu0 0
        %252 = vmatprep.subr.bf16.mxu0 0
        %253 = vmatpush1.bf16.msra.mxu0 %v236
        %254 = vmatprep.subr.bf16.mxu0 0
        %255 = vmatpush2.bf16.msra.mxu0 0
        %256 = vmatprep.subr.bf16.mxu0 0
        %257 = vmatpush2.bf16.msra.mxu0 0
        %258 = vmatprep.subr.bf16.mxu0 0
        %259 = vmatpush2.bf16.msra.mxu0 0
        %260 = vmatprep.subr.bf16.mxu0 0
        %261 = vmatpush2.bf16.msra.mxu0 0
        %262 = vmatprep.subr.bf16.mxu0 0
        %263 = vmatpush2.bf16.msra.mxu0 0
        %264 = vmatprep.subr.bf16.mxu0 0
        %265 = vmatpush2.bf16.msra.mxu0 0
        %266 = vmatprep.subr.bf16.mxu0 0
        %267 = vmatpush2.bf16.msra.mxu0 0
        %268 = vmatprep.subr.bf16.mxu0 0
        %269 = vmatpush2.bf16.msra.mxu0 0
        %270 = vmatprep.mubr.bf16.mxu0 0
        %271 = vmatmul.mubr.bf16.gmra.mxu0 %v233
        %v272 = vpop.f32.mrf.mxu0
        %v273 = vadd.f32 0.0, %v272
        %v274 = vpop.f32.mrf.mxu0
        %v275 = vpop.f32.mrf.mxu0
        %v276 = vadd.f32 0.0, %v275
        %v277 = vpop.f32.mrf.mxu0
        %278 = vdwg.mxu0
        %vm279 = vcmask 130048
        %280 = vst.msk [vmem:[%s164] sm:$0xff] %vm279, %v273
        %281 = vst.msk [vmem:[%s164 + $0x8] sm:$0xff] %vm279, %v276
        %s282 = scalar_lea.vmem %s169, 4
        %v283 = vld [vmem:[%s282] sm:$0xf]
        %v285 = vsel %vm186, %v283, 0
        %287 = vmatprep.subr.bf16.mxu0 0
        %288 = vmatpush1.bf16.msra.mxu0 0
        %289 = vmatprep.subr.bf16.mxu0 0
        %290 = vmatpush1.bf16.msra.mxu0 0
        %291 = vmatprep.subr.bf16.mxu0 0
        %292 = vmatpush1.bf16.msra.mxu0 0
        %293 = vmatprep.subr.bf16.mxu0 0
        %294 = vmatpush1.bf16.msra.mxu0 0
        %295 = vmatprep.subr.bf16.mxu0 0
        %296 = vmatpush1.bf16.msra.mxu0 0
        %297 = vmatprep.subr.bf16.mxu0 0
        %298 = vmatpush1.bf16.msra.mxu0 0
        %299 = vmatprep.subr.bf16.mxu0 0
        %300 = vmatpush1.bf16.msra.mxu0 0
        %301 = vmatprep.subr.bf16.mxu0 0
        %302 = vmatpush1.bf16.msra.mxu0 %v285
        %303 = vmatprep.subr.bf16.mxu0 0
        %304 = vmatpush2.bf16.msra.mxu0 0
        %305 = vmatprep.subr.bf16.mxu0 0
        %306 = vmatpush2.bf16.msra.mxu0 0
        %307 = vmatprep.subr.bf16.mxu0 0
        %308 = vmatpush2.bf16.msra.mxu0 0
        %309 = vmatprep.subr.bf16.mxu0 0
        %310 = vmatpush2.bf16.msra.mxu0 0
        %311 = vmatprep.subr.bf16.mxu0 0
        %312 = vmatpush2.bf16.msra.mxu0 0
        %313 = vmatprep.subr.bf16.mxu0 0
        %314 = vmatpush2.bf16.msra.mxu0 0
        %315 = vmatprep.subr.bf16.mxu0 0
        %316 = vmatpush2.bf16.msra.mxu0 0
        %317 = vmatprep.subr.bf16.mxu0 0
        %318 = vmatpush2.bf16.msra.mxu0 0
        %319 = vmatprep.mubr.bf16.mxu0 0
        %320 = vmatmul.mubr.bf16.gmra.mxu0 %v184
        %v321 = vpop.f32.mrf.mxu0
        %v322 = vadd.f32 0.0, %v321
        %v323 = vpop.f32.mrf.mxu0
        %v324 = vpop.f32.mrf.mxu0
        %v325 = vadd.f32 0.0, %v324
        %v326 = vpop.f32.mrf.mxu0
        %327 = vdwg.mxu0
        %v328 = vpack.c.bf16 %v325, %v322
        %v330 = vsel %vm182, %v328, 0
        %332 = vmatprep.subr.bf16.mxu0 0
        %333 = vmatpush1.bf16.msra.mxu0 0
        %334 = vmatprep.subr.bf16.mxu0 0
        %335 = vmatpush1.bf16.msra.mxu0 0
        %336 = vmatprep.subr.bf16.mxu0 0
        %337 = vmatpush1.bf16.msra.mxu0 0
        %338 = vmatprep.subr.bf16.mxu0 0
        %339 = vmatpush1.bf16.msra.mxu0 0
        %340 = vmatprep.subr.bf16.mxu0 0
        %341 = vmatpush1.bf16.msra.mxu0 0
        %342 = vmatprep.subr.bf16.mxu0 0
        %343 = vmatpush1.bf16.msra.mxu0 0
        %344 = vmatprep.subr.bf16.mxu0 0
        %345 = vmatpush1.bf16.msra.mxu0 0
        %346 = vmatprep.subr.bf16.mxu0 0
        %347 = vmatpush1.bf16.msra.mxu0 %v236
        %348 = vmatprep.subr.bf16.mxu0 0
        %349 = vmatpush2.bf16.msra.mxu0 0
        %350 = vmatprep.subr.bf16.mxu0 0
        %351 = vmatpush2.bf16.msra.mxu0 0
        %352 = vmatprep.subr.bf16.mxu0 0
        %353 = vmatpush2.bf16.msra.mxu0 0
        %354 = vmatprep.subr.bf16.mxu0 0
        %355 = vmatpush2.bf16.msra.mxu0 0
        %356 = vmatprep.subr.bf16.mxu0 0
        %357 = vmatpush2.bf16.msra.mxu0 0
        %358 = vmatprep.subr.bf16.mxu0 0
        %359 = vmatpush2.bf16.msra.mxu0 0
        %360 = vmatprep.subr.bf16.mxu0 0
        %361 = vmatpush2.bf16.msra.mxu0 0
        %362 = vmatprep.subr.bf16.mxu0 0
        %363 = vmatpush2.bf16.msra.mxu0 0
        %364 = vmatprep.mubr.bf16.mxu0 0
        %365 = vmatmul.mubr.bf16.gmra.mxu0 %v330
        %v366 = vpop.f32.mrf.mxu0
        %v367 = vadd.f32 0.0, %v366
        %v368 = vpop.f32.mrf.mxu0
        %v369 = vpop.f32.mrf.mxu0
        %v370 = vadd.f32 0.0, %v369
        %v371 = vpop.f32.mrf.mxu0
        %372 = vdwg.mxu0
        %s373 = scalar_lea.vmem %s164, 16 [#allocation2]
        %374 = vst.msk [vmem:[%s373] sm:$0xff] %vm279, %v367
        %375 = vst.msk [vmem:[%s373 + $0x8] sm:$0xff] %vm279, %v370
        %s376 = scalar_lea.vmem %s169, 8
        %v377 = vld [vmem:[%s376] sm:$0xf]
        %v379 = vsel %vm186, %v377, 0
        %381 = vmatprep.subr.bf16.mxu0 0
        %382 = vmatpush1.bf16.msra.mxu0 0
        %383 = vmatprep.subr.bf16.mxu0 0
        %384 = vmatpush1.bf16.msra.mxu0 0
        %385 = vmatprep.subr.bf16.mxu0 0
        %386 = vmatpush1.bf16.msra.mxu0 0
        %387 = vmatprep.subr.bf16.mxu0 0
        %388 = vmatpush1.bf16.msra.mxu0 0
        %389 = vmatprep.subr.bf16.mxu0 0
        %390 = vmatpush1.bf16.msra.mxu0 0
        %391 = vmatprep.subr.bf16.mxu0 0
        %392 = vmatpush1.bf16.msra.mxu0 0
        %393 = vmatprep.subr.bf16.mxu0 0
        %394 = vmatpush1.bf16.msra.mxu0 0
        %395 = vmatprep.subr.bf16.mxu0 0
        %396 = vmatpush1.bf16.msra.mxu0 %v379
        %397 = vmatprep.subr.bf16.mxu0 0
        %398 = vmatpush2.bf16.msra.mxu0 0
        %399 = vmatprep.subr.bf16.mxu0 0
        %400 = vmatpush2.bf16.msra.mxu0 0
        %401 = vmatprep.subr.bf16.mxu0 0
        %402 = vmatpush2.bf16.msra.mxu0 0
        %403 = vmatprep.subr.bf16.mxu0 0
        %404 = vmatpush2.bf16.msra.mxu0 0
        %405 = vmatprep.subr.bf16.mxu0 0
        %406 = vmatpush2.bf16.msra.mxu0 0
        %407 = vmatprep.subr.bf16.mxu0 0
        %408 = vmatpush2.bf16.msra.mxu0 0
        %409 = vmatprep.subr.bf16.mxu0 0
        %410 = vmatpush2.bf16.msra.mxu0 0
        %411 = vmatprep.subr.bf16.mxu0 0
        %412 = vmatpush2.bf16.msra.mxu0 0
        %413 = vmatprep.mubr.bf16.mxu0 0
        %414 = vmatmul.mubr.bf16.gmra.mxu0 %v184
        %v415 = vpop.f32.mrf.mxu0
        %v416 = vadd.f32 0.0, %v415
        %v417 = vpop.f32.mrf.mxu0
        %v418 = vpop.f32.mrf.mxu0
        %v419 = vadd.f32 0.0, %v418
        %v420 = vpop.f32.mrf.mxu0
        %421 = vdwg.mxu0
        %v422 = vpack.c.bf16 %v419, %v416
        %v424 = vsel %vm182, %v422, 0
        %426 = vmatprep.subr.bf16.mxu0 0
        %427 = vmatpush1.bf16.msra.mxu0 0
        %428 = vmatprep.subr.bf16.mxu0 0
        %429 = vmatpush1.bf16.msra.mxu0 0
        %430 = vmatprep.subr.bf16.mxu0 0
        %431 = vmatpush1.bf16.msra.mxu0 0
        %432 = vmatprep.subr.bf16.mxu0 0
        %433 = vmatpush1.bf16.msra.mxu0 0
        %434 = vmatprep.subr.bf16.mxu0 0
        %435 = vmatpush1.bf16.msra.mxu0 0
        %436 = vmatprep.subr.bf16.mxu0 0
        %437 = vmatpush1.bf16.msra.mxu0 0
        %438 = vmatprep.subr.bf16.mxu0 0
        %439 = vmatpush1.bf16.msra.mxu0 0
        %440 = vmatprep.subr.bf16.mxu0 0
        %441 = vmatpush1.bf16.msra.mxu0 %v236
        %442 = vmatprep.subr.bf16.mxu0 0
        %443 = vmatpush2.bf16.msra.mxu0 0
        %444 = vmatprep.subr.bf16.mxu0 0
        %445 = vmatpush2.bf16.msra.mxu0 0
        %446 = vmatprep.subr.bf16.mxu0 0
        %447 = vmatpush2.bf16.msra.mxu0 0
        %448 = vmatprep.subr.bf16.mxu0 0
        %449 = vmatpush2.bf16.msra.mxu0 0
        %450 = vmatprep.subr.bf16.mxu0 0
        %451 = vmatpush2.bf16.msra.mxu0 0
        %452 = vmatprep.subr.bf16.mxu0 0
        %453 = vmatpush2.bf16.msra.mxu0 0
        %454 = vmatprep.subr.bf16.mxu0 0
        %455 = vmatpush2.bf16.msra.mxu0 0
        %456 = vmatprep.subr.bf16.mxu0 0
        %457 = vmatpush2.bf16.msra.mxu0 0
        %458 = vmatprep.mubr.bf16.mxu0 0
        %459 = vmatmul.mubr.bf16.gmra.mxu0 %v424
        %v460 = vpop.f32.mrf.mxu0
        %v461 = vadd.f32 0.0, %v460
        %v462 = vpop.f32.mrf.mxu0
        %v463 = vpop.f32.mrf.mxu0
        %v464 = vadd.f32 0.0, %v463
        %v465 = vpop.f32.mrf.mxu0
        %466 = vdwg.mxu0
        %s467 = scalar_lea.vmem %s164, 32 [#allocation2]
        %468 = vst.msk [vmem:[%s467] sm:$0xff] %vm279, %v461
        %469 = vst.msk [vmem:[%s467 + $0x8] sm:$0xff] %vm279, %v464
        %s470 = scalar_lea.vmem %s169, 12
        %v471 = vld [vmem:[%s470] sm:$0xf]
        %v473 = vsel %vm186, %v471, 0
        %475 = vmatprep.subr.bf16.mxu0 0
        %476 = vmatpush1.bf16.msra.mxu0 0
        %477 = vmatprep.subr.bf16.mxu0 0
        %478 = vmatpush1.bf16.msra.mxu0 0
        %479 = vmatprep.subr.bf16.mxu0 0
        %480 = vmatpush1.bf16.msra.mxu0 0
        %481 = vmatprep.subr.bf16.mxu0 0
        %482 = vmatpush1.bf16.msra.mxu0 0
        %483 = vmatprep.subr.bf16.mxu0 0
        %484 = vmatpush1.bf16.msra.mxu0 0
        %485 = vmatprep.subr.bf16.mxu0 0
        %486 = vmatpush1.bf16.msra.mxu0 0
        %487 = vmatprep.subr.bf16.mxu0 0
        %488 = vmatpush1.bf16.msra.mxu0 0
        %489 = vmatprep.subr.bf16.mxu0 0
        %490 = vmatpush1.bf16.msra.mxu0 %v473
        %491 = vmatprep.subr.bf16.mxu0 0
        %492 = vmatpush2.bf16.msra.mxu0 0
        %493 = vmatprep.subr.bf16.mxu0 0
        %494 = vmatpush2.bf16.msra.mxu0 0
        %495 = vmatprep.subr.bf16.mxu0 0
        %496 = vmatpush2.bf16.msra.mxu0 0
        %497 = vmatprep.subr.bf16.mxu0 0
        %498 = vmatpush2.bf16.msra.mxu0 0
        %499 = vmatprep.subr.bf16.mxu0 0
        %500 = vmatpush2.bf16.msra.mxu0 0
        %501 = vmatprep.subr.bf16.mxu0 0
        %502 = vmatpush2.bf16.msra.mxu0 0
        %503 = vmatprep.subr.bf16.mxu0 0
        %504 = vmatpush2.bf16.msra.mxu0 0
        %505 = vmatprep.subr.bf16.mxu0 0
        %506 = vmatpush2.bf16.msra.mxu0 0
        %507 = vmatprep.mubr.bf16.mxu0 0
        %508 = vmatmul.mubr.bf16.gmra.mxu0 %v184
        %v509 = vpop.f32.mrf.mxu0
        %v510 = vadd.f32 0.0, %v509
        %v511 = vpop.f32.mrf.mxu0
        %v512 = vpop.f32.mrf.mxu0
        %v513 = vadd.f32 0.0, %v512
        %v514 = vpop.f32.mrf.mxu0
        %515 = vdwg.mxu0
        %v516 = vpack.c.bf16 %v513, %v510
        %v518 = vsel %vm182, %v516, 0
        %520 = vmatprep.subr.bf16.mxu0 0
        %521 = vmatpush1.bf16.msra.mxu0 0
        %522 = vmatprep.subr.bf16.mxu0 0
        %523 = vmatpush1.bf16.msra.mxu0 0
        %524 = vmatprep.subr.bf16.mxu0 0
        %525 = vmatpush1.bf16.msra.mxu0 0
        %526 = vmatprep.subr.bf16.mxu0 0
        %527 = vmatpush1.bf16.msra.mxu0 0
        %528 = vmatprep.subr.bf16.mxu0 0
        %529 = vmatpush1.bf16.msra.mxu0 0
        %530 = vmatprep.subr.bf16.mxu0 0
        %531 = vmatpush1.bf16.msra.mxu0 0
        %532 = vmatprep.subr.bf16.mxu0 0
        %533 = vmatpush1.bf16.msra.mxu0 0
        %534 = vmatprep.subr.bf16.mxu0 0
        %535 = vmatpush1.bf16.msra.mxu0 %v236
        %536 = vmatprep.subr.bf16.mxu0 0
        %537 = vmatpush2.bf16.msra.mxu0 0
        %538 = vmatprep.subr.bf16.mxu0 0
        %539 = vmatpush2.bf16.msra.mxu0 0
        %540 = vmatprep.subr.bf16.mxu0 0
        %541 = vmatpush2.bf16.msra.mxu0 0
        %542 = vmatprep.subr.bf16.mxu0 0
        %543 = vmatpush2.bf16.msra.mxu0 0
        %544 = vmatprep.subr.bf16.mxu0 0
        %545 = vmatpush2.bf16.msra.mxu0 0
        %546 = vmatprep.subr.bf16.mxu0 0
        %547 = vmatpush2.bf16.msra.mxu0 0
        %548 = vmatprep.subr.bf16.mxu0 0
        %549 = vmatpush2.bf16.msra.mxu0 0
        %550 = vmatprep.subr.bf16.mxu0 0
        %551 = vmatpush2.bf16.msra.mxu0 0
        %552 = vmatprep.mubr.bf16.mxu0 0
        %553 = vmatmul.mubr.bf16.gmra.mxu0 %v518
        %v554 = vpop.f32.mrf.mxu0
        %v555 = vadd.f32 0.0, %v554
        %v556 = vpop.f32.mrf.mxu0
        %v557 = vpop.f32.mrf.mxu0
        %v558 = vadd.f32 0.0, %v557
        %v559 = vpop.f32.mrf.mxu0
        %560 = vdwg.mxu0
        %s561 = scalar_lea.vmem %s164, 48 [#allocation2]
        %562 = vst.msk [vmem:[%s561] sm:$0xff] %vm279, %v555
        %563 = vst.msk [vmem:[%s561 + $0x8] sm:$0xff] %vm279, %v558
        %s564 = sand.u32 %s93, 1
        %s565 = scalar_lea.sflag [#allocation3], %s564
        %s566 = sand.u32 %s93, 1
        %s567 = smul.addr %s566, 64
        %s568 = scalar_lea.vmem [#allocation2], %s567
        // Predicated region
        $region33: #{deeplab_change_detection_forward.3} parent=31 // pred_check
          %p569 = pneg %p103
        $region34: #{deeplab_change_detection_forward.3} parent=31 // pred_check_branch
          %571 = sbr.rel (%p569) target = $region36
        $region35: #{deeplab_change_detection_forward.3} parent=31 // pred_region
          %s572 = smul.u32 4, %s17
          %s574 = ssub.s32 1024, 1024
          %575 = vsyncadd %s565, %s574
          %s576 = smul.addr %s572, 2
          %s577 = smul.addr %s576, 128
          %s578 = scalar_lea.hbm %s3, %s577
          %s579 = sshll.u32 %s568, 4
          %s580 = int_to_ptr.vmem [resolvable:$true] %s579
          %585 = dma.vmem_to_hbm [thread:$0]  %s580, 1024, %s578, %s565, 128, 128, 8
        $region36: #{deeplab_change_detection_forward.3} parent=31 // pred_fallthru
          _
      $region32: #{deeplab_change_detection_forward.3} parent=5 // pred_fallthru
        _
      %p586 = scmp.le.s32.totalorder 2, %s12
      // Predicated region
      $region37: #{deeplab_change_detection_forward.3} parent=5 // pred_check
        %p587 = pneg %p586
      $region38: #{deeplab_change_detection_forward.3} parent=5 // pred_check_branch
        %589 = sbr.rel (%p587) target = $region40
      $region39: #{deeplab_change_detection_forward.3} parent=5 // pred_region
        %s590 = ssub.s32 %s12, 2
        // Predicated region
        $region41: #{deeplab_change_detection_forward.3} parent=39 // pred_check
          %p591 = pneg %p109
        $region42: #{deeplab_change_detection_forward.3} parent=39 // pred_check_branch
          %593 = sbr.rel (%p591) target = $region44
        $region43: #{deeplab_change_detection_forward.3} parent=39 // pred_region
          %s594 = sand.u32 %s94, 1
          %s595 = scalar_lea.sflag [#allocation3], %s594
          %s596 = sand.u32 %s94, 1
          %s597 = smul.addr %s596, 64
          %s598 = scalar_lea.vmem [#allocation2], %s597
          %599 = dma.done %s595, 1024
        $region44: #{deeplab_change_detection_forward.3} parent=39 // pred_fallthru
          _
      $region40: #{deeplab_change_detection_forward.3} parent=5 // pred_fallthru
        _
    $region6: #{deeplab_change_detection_forward.3} parent=1 // loop_footer
      %s16 = sadd.s32 1, %s12
    $region7: #{deeplab_change_detection_forward.3} parent=1 // loop_footer_branch
      %11 = sbr.rel target = $region3
    $region8: #{deeplab_change_detection_forward.3} parent=1 // loop_exit
      _
    %600 = vsyncpa [#allocation3], 1
    %s601 = scalar_lea.sflag [#allocation3], 1
    %602 = vsyncpa %s601, 1

</llo_original>
